<compile_context>
chip_gen: v5e
topology: v5e:2x2
jax: 0.10.0
libtpu: 0.0.40
codegen_flags: <defaults>
</compile_context>

<pallas_src>
import jax
import jax.numpy as jnp
import numpy as np
from jax.experimental import pallas as pl
from jax.experimental.pallas import tpu as pltpu


def _leaky(x, slope):
    return jnp.where(x >= 0, x, slope * x)


def make_crnn2_kernel(Bp, T, C_in3, C_out, H, T2, num_layers, num_class, slope=0.9):
    """Fused forward kernel for a per-program batch slab of size Bp.
       Signature: kernel(xim, wconv, bconv, [w_ih, w_hh, b]*L, w3, b3, wc, bc, out)"""

    def kernel(xim_ref, wconv_ref, bconv_ref, *rest):
        lstm_refs = rest[: 3 * num_layers]
        w3_ref, b3_ref, wc_ref, bc_ref, out_ref = rest[3 * num_layers:]

        # ---- Conv1d(k=3, stride=1, pad=1): single im2col matmul + bias + LeakyReLU ----
        xim = xim_ref[...].reshape(Bp * T, C_in3)                 # rows = b*T + t
        y = jnp.dot(xim, wconv_ref[...], preferred_element_type=jnp.float32)
        y = _leaky(y + bconv_ref[...], slope)                     # (Bp*T, C_out)

        # ---- MaxPool1d(2), hoisted out of the recurrence (T even) ----
        pooled = jnp.max(y.reshape(Bp * T2, 2, C_out), axis=1)    # rows = b*T2 + t

        # ---- LSTM weights (prepped outside): (in_l,4H), (H,4H), (1,4H); gate order i,f,o,g ----
        w_ih = [lstm_refs[3 * l][...] for l in range(num_layers)]
        w_hh = [lstm_refs[3 * l + 1][...] for l in range(num_layers)]
        b_g = [lstm_refs[3 * l + 2][...] for l in range(num_layers)]

        # Hoisted input projection for layer 0: one matmul for all T2 steps (bias folded in).
        xg0 = (jnp.dot(pooled, w_ih[0], preferred_element_type=jnp.float32)
               + b_g[0]).reshape(Bp, T2, 4 * H)

        h = [jnp.zeros((Bp, H), jnp.float32) for _ in range(num_layers)]
        c = [jnp.zeros((Bp, H), jnp.float32) for _ in range(num_layers)]
        hs = []

        # ---- serialized recurrence: only h @ W_hh (+ gate nonlinearities) per step ----
        for t in range(T2):
            for l in range(num_layers):
                if l == 0:
                    gates = xg0[:, t, :] + jnp.dot(
                        h[0], w_hh[0], preferred_element_type=jnp.float32)
                else:
                    gates = (jnp.dot(h[l - 1], w_ih[l], preferred_element_type=jnp.float32)
                             + jnp.dot(h[l], w_hh[l], preferred_element_type=jnp.float32)
                             + b_g[l])
                sg = jax.nn.sigmoid(gates[:, : 3 * H])            # i, f, o in one launch
                gg = jnp.tanh(gates[:, 3 * H:])                   # g in one launch
                i_g = sg[:, :H]
                f_g = sg[:, H:2 * H]
                o_g = sg[:, 2 * H:3 * H]
                c[l] = f_g * c[l] + i_g * gg
                h[l] = o_g * jnp.tanh(c[l])
            hs.append(h[-1])

        # ---- deferred linear3: one lane-dense K = T2*H matmul (time-major flatten) ----
        hcat = jnp.concatenate(hs, axis=1)                        # (Bp, T2*H)
        z = _leaky(jnp.dot(hcat, w3_ref[...], preferred_element_type=jnp.float32)
                   + b3_ref[...], slope)                          # (Bp, H)

        logits = _leaky(jnp.dot(z, wc_ref[...], preferred_element_type=jnp.float32)
                        + bc_ref[...], slope)                     # (Bp, num_class)

        # ---- LogSoftmax(dim=1) ----
        m = jnp.max(logits, axis=1, keepdims=True)
        s = logits - m
        lse = jnp.log(jnp.sum(jnp.exp(s), axis=1, keepdims=True))
        out_ref[...] = (s - lse).reshape(Bp, 1, num_class)

    return kernel


def _multi_tensorcore_chip() -> bool:
    """True on chips with >1 TensorCore per JAX device (v4 / v5p / v7x)."""
    try:
        kind = jax.devices()[0].device_kind.lower()
    except Exception:
        return False
    return any(tag in kind for tag in ("v4", "v5p", "v7", "7x"))


def crnn2_forward(x, params, *, num_layers, slope=0.9, batch_grid=None):
    B, T, C_in = x.shape
    C_out = params["bconv"].shape[-1]
    H = params["b3"].shape[-1]
    T2 = T // 2
    num_class = params["bc"].shape[-1]
    C_in3 = 3 * C_in

    if batch_grid is None:
        batch_grid = _multi_tensorcore_chip() and B > 1

    # plain-JAX glue: conv zero-padding + im2col patch layout (no compute)
    xp = jnp.pad(x, ((0, 0), (1, 1), (0, 0)))
    xim = jnp.concatenate([xp[:, k:k + T, :] for k in range(3)], axis=-1)  # (B, T, 3*C_in)

    weights = [params["wconv"], params["bconv"]]
    for l in range(num_layers):
        weights += [params[f"w_ih_{l}"], params[f"w_hh_{l}"], params[f"b_{l}"]]
    weights += [params["w3"], params["b3"], params["wc"], params["bc"]]

    out_shape = jax.ShapeDtypeStruct((B, 1, num_class), jnp.float32)

    if batch_grid:
        # One batch row per program; independent end-to-end -> "parallel" across TCs.
        kernel = make_crnn2_kernel(1, T, C_in3, C_out, H, T2, num_layers, num_class, slope)
        in_specs = [pl.BlockSpec((1, T, C_in3), lambda b: (b, 0, 0))]
        for w in weights:
            shp = tuple(w.shape)
            in_specs.append(pl.BlockSpec(shp, lambda b, _nd=len(shp): (0,) * _nd))
        out = pl.pallas_call(
            kernel,
            out_shape=out_shape,
            grid=(B,),
            in_specs=in_specs,
            out_specs=pl.BlockSpec((1, 1, num_class), lambda b: (b, 0, 0)),
            compiler_params=pltpu.CompilerParams(dimension_semantics=("parallel",)),
        )(xim, *weights)
    else:
        # Single program, everything resident in VMEM (total footprint << 1 MiB).
        kernel = make_crnn2_kernel(B, T, C_in3, C_out, H, T2, num_layers, num_class, slope)
        vspec = pl.BlockSpec(memory_space=pltpu.MemorySpace.VMEM)
        out = pl.pallas_call(
            kernel,
            out_shape=out_shape,
            in_specs=[vspec] * (1 + len(weights)),
            out_specs=vspec,
        )(xim, *weights)

    return out.reshape(B, num_class)


# --------------------------- parameters & reference ---------------------------

def init_torch_params(key, input_size, latent_size, num_class, max_len, num_layers):
    """Deterministic synthetic parameters in PyTorch layout / gate order (i,f,g,o)."""
    C_out = 2 * latent_size
    H = latent_size
    T2 = max_len // 2
    keys = jax.random.split(key, 4 * num_layers + 6)

    def uni(k, shape, bound):
        return jax.random.uniform(k, shape, jnp.float32, -bound, bound)

    p = {}
    ki = 0
    cb = 1.0 / np.sqrt(input_size * 3)
    p["conv_w"] = uni(keys[ki], (C_out, input_size, 3), cb); ki += 1
    p["conv_b"] = uni(keys[ki], (C_out,), cb); ki += 1
    rb = 1.0 / np.sqrt(H)
    for l in range(num_layers):
        in_l = C_out if l == 0 else H
        p[f"w_ih_l{l}"] = uni(keys[ki], (4 * H, in_l), rb); ki += 1
        p[f"w_hh_l{l}"] = uni(keys[ki], (4 * H, H), rb); ki += 1
        p[f"b_ih_l{l}"] = uni(keys[ki], (4 * H,), rb); ki += 1
        p[f"b_hh_l{l}"] = uni(keys[ki], (4 * H,), rb); ki += 1
    lb = 1.0 / np.sqrt(H * T2)
    p["lin3_w"] = uni(keys[ki], (H, H * T2), lb); ki += 1
    p["lin3_b"] = uni(keys[ki], (H,), lb); ki += 1
    kb = 1.0 / np.sqrt(H)
    p["cls_w"] = uni(keys[ki], (num_class, H), kb); ki += 1
    p["cls_b"] = uni(keys[ki], (num_class,), kb); ki += 1
    return p


def prep_kernel_params(raw, num_layers):
    """PyTorch layout -> kernel layout (im2col conv weight, gates reordered to i,f,o,g,
       fused LSTM bias, transposed linears, linear3 flattened time-major)."""
    H = raw["lin3_b"].shape[0]
    p = {}
    w = raw["conv_w"]                                           # (C_out, C_in, 3)
    p["wconv"] = jnp.transpose(w, (2, 1, 0)).reshape(-1, w.shape[0])   # (3*C_in, C_out)
    p["bconv"] = raw["conv_b"].reshape(1, -1)
    # PyTorch rows are [i, f, g, o]; kernel wants columns [i, f, o, g].
    perm = np.concatenate([np.arange(0, H), np.arange(H, 2 * H),
                           np.arange(3 * H, 4 * H), np.arange(2 * H, 3 * H)])
    for l in range(num_layers):
        p[f"w_ih_{l}"] = raw[f"w_ih_l{l}"][perm].T              # (in_l, 4H)
        p[f"w_hh_{l}"] = raw[f"w_hh_l{l}"][perm].T              # (H, 4H)
        p[f"b_{l}"] = (raw[f"b_ih_l{l}"] + raw[f"b_hh_l{l}"])[perm].reshape(1, -1)
    p["w3"] = raw["lin3_w"].T                                   # (T2*H, H), time-major rows
    p["b3"] = raw["lin3_b"].reshape(1, -1)
    p["wc"] = raw["cls_w"].T
    p["bc"] = raw["cls_b"].reshape(1, -1)
    return p


def crnn2_reference(x, raw, num_layers, slope=0.9):
    """Plain-JAX reference of the PyTorch forward pass (i,f,g,o gate order)."""
    B, T, C_in = x.shape
    conv_w = raw["conv_w"]
    C_out = conv_w.shape[0]
    H = raw["lin3_b"].shape[0]
    T2 = T // 2
    xp = jnp.pad(x, ((0, 0), (1, 1), (0, 0)))
    acc = jnp.zeros((B, T, C_out), jnp.float32)
    for k in range(3):
        acc = acc + jnp.einsum("btc,oc->bto", xp[:, k:k + T, :], conv_w[:, :, k])
    acc = acc + raw["conv_b"][None, None, :]
    y = jnp.where(acc >= 0, acc, slope * acc)
    pooled = jnp.max(y.reshape(B, T2, 2, C_out), axis=2)
    h = [jnp.zeros((B, H)) for _ in range(num_layers)]
    c = [jnp.zeros((B, H)) for _ in range(num_layers)]
    outs = []
    for t in range(T2):
        inp = pooled[:, t]
        for l in range(num_layers):
            gates = (inp @ raw[f"w_ih_l{l}"].T + h[l] @ raw[f"w_hh_l{l}"].T
                     + raw[f"b_ih_l{l}"] + raw[f"b_hh_l{l}"])
            i_g = jax.nn.sigmoid(gates[:, :H])
            f_g = jax.nn.sigmoid(gates[:, H:2 * H])
            g_g = jnp.tanh(gates[:, 2 * H:3 * H])
            o_g = jax.nn.sigmoid(gates[:, 3 * H:])
            c[l] = f_g * c[l] + i_g * g_g
            h[l] = o_g * jnp.tanh(c[l])
            inp = h[l]
        outs.append(h[-1])
    flat = jnp.stack(outs, axis=1).reshape(B, T2 * H)
    z = flat @ raw["lin3_w"].T + raw["lin3_b"]
    z = jnp.where(z >= 0, z, slope * z)
    logits = z @ raw["cls_w"].T + raw["cls_b"]
    logits = jnp.where(logits >= 0, logits, slope * logits)
    return jax.nn.log_softmax(logits, axis=1)


if __name__ == "__main__":
    # CRNN2(input_size=4, latent_size=16, num_class=8, max_len=16, num_layers=1, r_model='LSTM')
    B, input_size, latent_size, num_class, max_len, num_layers = 2, 4, 16, 8, 16, 1

    key = jax.random.PRNGKey(0)
    kx, kp = jax.random.split(key)
    x = jax.random.normal(kx, (B, max_len, input_size), jnp.float32)

    raw = init_torch_params(kp, input_size, latent_size, num_class, max_len, num_layers)
    params = prep_kernel_params(raw, num_layers)
    ref = np.asarray(crnn2_reference(x, raw, num_layers))

    # Single-program path (preferred on 1-TC chips: v5e / v6e).
    out_single = crnn2_forward(x, params, num_layers=num_layers, batch_grid=False)
    out_single = jax.block_until_ready(out_single)
    np.testing.assert_allclose(np.asarray(out_single), ref, atol=1e-4, rtol=1e-4)

    # Batch-gridded path (uses both TensorCores on v7x / v4 / v5p via "parallel").
    out_grid = crnn2_forward(x, params, num_layers=num_layers, batch_grid=True)
    out_grid = jax.block_until_ready(out_grid)
    np.testing.assert_allclose(np.asarray(out_grid), ref, atol=1e-4, rtol=1e-4)

    # Auto path (chip-gated choice between the two).
    out = jax.block_until_ready(crnn2_forward(x, params, num_layers=num_layers))
    assert out.shape == (B, num_class)

    print("KERNEL_OK")
</pallas_src>

<mosaic_0001>
module attributes {stable_mosaic.version = 11 : i64} {
  func.func @kernel(%arg0: memref<2x16x12xf32, #tpu.memory_space<vmem>>, %arg1: memref<12x32xf32, #tpu.memory_space<vmem>>, %arg2: memref<1x32xf32, #tpu.memory_space<vmem>>, %arg3: memref<32x64xf32, #tpu.memory_space<vmem>>, %arg4: memref<16x64xf32, #tpu.memory_space<vmem>>, %arg5: memref<1x64xf32, #tpu.memory_space<vmem>>, %arg6: memref<128x16xf32, #tpu.memory_space<vmem>>, %arg7: memref<1x16xf32, #tpu.memory_space<vmem>>, %arg8: memref<16x8xf32, #tpu.memory_space<vmem>>, %arg9: memref<1x8xf32, #tpu.memory_space<vmem>>, %arg10: memref<2x1x8xf32, #tpu.memory_space<vmem>>) attributes {dimension_semantics = [], scalar_prefetch = 0 : i64, scratch_operands = 0 : i64, tpu.core_type = #tpu.core_type<tc>} {
    %c0 = arith.constant 0 : index
    %c0_0 = arith.constant 0 : index
    %c0_1 = arith.constant 0 : index
    %0 = vector.load %arg0[%c0, %c0_0, %c0_1] : memref<2x16x12xf32, #tpu.memory_space<vmem>>, vector<2x16x12xf32>
    %1 = vector.shape_cast %0 : vector<2x16x12xf32> to vector<32x12xf32>
    %c0_2 = arith.constant 0 : index
    %c0_3 = arith.constant 0 : index
    %2 = vector.load %arg1[%c0_2, %c0_3] : memref<12x32xf32, #tpu.memory_space<vmem>>, vector<12x32xf32>
    %cst = arith.constant dense<0.000000e+00> : vector<32x32xf32>
    %3 = tpu.matmul %1, %2, %cst {dimension_numbers = #tpu.dot_dimension_numbers<[1], [0], [0], [1], [0, 0, 1, 1], [], []>} : vector<32x12xf32>, vector<12x32xf32>, vector<32x32xf32> -> vector<32x32xf32>
    %c0_4 = arith.constant 0 : index
    %c0_5 = arith.constant 0 : index
    %4 = vector.load %arg2[%c0_4, %c0_5] : memref<1x32xf32, #tpu.memory_space<vmem>>, vector<1x32xf32>
    %5 = vector.broadcast %4 : vector<1x32xf32> to vector<32x32xf32>
    %6 = arith.addf %3, %5 : vector<32x32xf32>
    %cst_6 = arith.constant 0.000000e+00 : f32
    %7 = vector.broadcast %cst_6 : f32 to vector<32x32xf32>
    %8 = arith.cmpf oge, %6, %7 : vector<32x32xf32>
    %cst_7 = arith.constant 0.899999976 : f32
    %9 = vector.broadcast %cst_7 : f32 to vector<32x32xf32>
    %10 = arith.mulf %9, %6 : vector<32x32xf32>
    %11 = arith.select %8, %6, %10 : vector<32x32xi1>, vector<32x32xf32>
    %12 = vector.shape_cast %11 : vector<32x32xf32> to vector<16x2x32xf32>
    %cst_8 = arith.constant dense<0xFF800000> : vector<16x32xf32>
    %13 = vector.multi_reduction <maximumf>, %12, %cst_8 [1] : vector<16x2x32xf32> to vector<16x32xf32>
    %c0_9 = arith.constant 0 : index
    %c0_10 = arith.constant 0 : index
    %14 = vector.load %arg3[%c0_9, %c0_10] : memref<32x64xf32, #tpu.memory_space<vmem>>, vector<32x64xf32>
    %c0_11 = arith.constant 0 : index
    %c0_12 = arith.constant 0 : index
    %15 = vector.load %arg4[%c0_11, %c0_12] : memref<16x64xf32, #tpu.memory_space<vmem>>, vector<16x64xf32>
    %c0_13 = arith.constant 0 : index
    %c0_14 = arith.constant 0 : index
    %16 = vector.load %arg5[%c0_13, %c0_14] : memref<1x64xf32, #tpu.memory_space<vmem>>, vector<1x64xf32>
    %cst_15 = arith.constant dense<0.000000e+00> : vector<16x64xf32>
    %17 = tpu.matmul %13, %14, %cst_15 {dimension_numbers = #tpu.dot_dimension_numbers<[1], [0], [0], [1], [0, 0, 1, 1], [], []>} : vector<16x32xf32>, vector<32x64xf32>, vector<16x64xf32> -> vector<16x64xf32>
    %18 = vector.broadcast %16 : vector<1x64xf32> to vector<16x64xf32>
    %19 = arith.addf %17, %18 : vector<16x64xf32>
    %20 = vector.shape_cast %19 : vector<16x64xf32> to vector<2x8x64xf32>
    %cst_16 = arith.constant 0.000000e+00 : f32
    %21 = vector.broadcast %cst_16 : f32 to vector<2x16xf32>
    %cst_17 = arith.constant 0.000000e+00 : f32
    %22 = vector.broadcast %cst_17 : f32 to vector<2x16xf32>
    %23 = vector.extract_strided_slice %20 {offsets = [0, 0, 0], sizes = [2, 1, 64], strides = [1, 1, 1]} : vector<2x8x64xf32> to vector<2x1x64xf32>
    %24 = vector.shape_cast %23 : vector<2x1x64xf32> to vector<2x64xf32>
    %cst_18 = arith.constant dense<0.000000e+00> : vector<2x64xf32>
    %25 = tpu.matmul %21, %15, %cst_18 {dimension_numbers = #tpu.dot_dimension_numbers<[1], [0], [0], [1], [0, 0, 1, 1], [], []>} : vector<2x16xf32>, vector<16x64xf32>, vector<2x64xf32> -> vector<2x64xf32>
    %26 = arith.addf %24, %25 : vector<2x64xf32>
    %27 = vector.extract_strided_slice %26 {offsets = [0, 0], sizes = [2, 48], strides = [1, 1]} : vector<2x64xf32> to vector<2x48xf32>
    %28 = arith.negf %27 : vector<2x48xf32>
    %29 = math.exp %28 : vector<2x48xf32>
    %cst_19 = arith.constant 1.000000e+00 : f32
    %30 = vector.broadcast %cst_19 : f32 to vector<2x48xf32>
    %31 = arith.addf %30, %29 : vector<2x48xf32>
    %32 = arith.divf %30, %31 : vector<2x48xf32>
    %33 = vector.extract_strided_slice %26 {offsets = [0, 48], sizes = [2, 16], strides = [1, 1]} : vector<2x64xf32> to vector<2x16xf32>
    %34 = math.tanh %33 : vector<2x16xf32>
    %35 = vector.extract_strided_slice %32 {offsets = [0, 0], sizes = [2, 16], strides = [1, 1]} : vector<2x48xf32> to vector<2x16xf32>
    %36 = vector.extract_strided_slice %32 {offsets = [0, 16], sizes = [2, 16], strides = [1, 1]} : vector<2x48xf32> to vector<2x16xf32>
    %37 = vector.extract_strided_slice %32 {offsets = [0, 32], sizes = [2, 16], strides = [1, 1]} : vector<2x48xf32> to vector<2x16xf32>
    %38 = arith.mulf %36, %22 : vector<2x16xf32>
    %39 = arith.mulf %35, %34 : vector<2x16xf32>
    %40 = arith.addf %38, %39 : vector<2x16xf32>
    %41 = math.tanh %40 : vector<2x16xf32>
    %42 = arith.mulf %37, %41 : vector<2x16xf32>
    %43 = vector.extract_strided_slice %20 {offsets = [0, 1, 0], sizes = [2, 1, 64], strides = [1, 1, 1]} : vector<2x8x64xf32> to vector<2x1x64xf32>
    %44 = vector.shape_cast %43 : vector<2x1x64xf32> to vector<2x64xf32>
    %cst_20 = arith.constant dense<0.000000e+00> : vector<2x64xf32>
    %45 = tpu.matmul %42, %15, %cst_20 {dimension_numbers = #tpu.dot_dimension_numbers<[1], [0], [0], [1], [0, 0, 1, 1], [], []>} : vector<2x16xf32>, vector<16x64xf32>, vector<2x64xf32> -> vector<2x64xf32>
    %46 = arith.addf %44, %45 : vector<2x64xf32>
    %47 = vector.extract_strided_slice %46 {offsets = [0, 0], sizes = [2, 48], strides = [1, 1]} : vector<2x64xf32> to vector<2x48xf32>
    %48 = arith.negf %47 : vector<2x48xf32>
    %49 = math.exp %48 : vector<2x48xf32>
    %cst_21 = arith.constant 1.000000e+00 : f32
    %50 = vector.broadcast %cst_21 : f32 to vector<2x48xf32>
    %51 = arith.addf %50, %49 : vector<2x48xf32>
    %52 = arith.divf %50, %51 : vector<2x48xf32>
    %53 = vector.extract_strided_slice %46 {offsets = [0, 48], sizes = [2, 16], strides = [1, 1]} : vector<2x64xf32> to vector<2x16xf32>
    %54 = math.tanh %53 : vector<2x16xf32>
    %55 = vector.extract_strided_slice %52 {offsets = [0, 0], sizes = [2, 16], strides = [1, 1]} : vector<2x48xf32> to vector<2x16xf32>
    %56 = vector.extract_strided_slice %52 {offsets = [0, 16], sizes = [2, 16], strides = [1, 1]} : vector<2x48xf32> to vector<2x16xf32>
    %57 = vector.extract_strided_slice %52 {offsets = [0, 32], sizes = [2, 16], strides = [1, 1]} : vector<2x48xf32> to vector<2x16xf32>
    %58 = arith.mulf %56, %40 : vector<2x16xf32>
    %59 = arith.mulf %55, %54 : vector<2x16xf32>
    %60 = arith.addf %58, %59 : vector<2x16xf32>
    %61 = math.tanh %60 : vector<2x16xf32>
    %62 = arith.mulf %57, %61 : vector<2x16xf32>
    %63 = vector.extract_strided_slice %20 {offsets = [0, 2, 0], sizes = [2, 1, 64], strides = [1, 1, 1]} : vector<2x8x64xf32> to vector<2x1x64xf32>
    %64 = vector.shape_cast %63 : vector<2x1x64xf32> to vector<2x64xf32>
    %cst_22 = arith.constant dense<0.000000e+00> : vector<2x64xf32>
    %65 = tpu.matmul %62, %15, %cst_22 {dimension_numbers = #tpu.dot_dimension_numbers<[1], [0], [0], [1], [0, 0, 1, 1], [], []>} : vector<2x16xf32>, vector<16x64xf32>, vector<2x64xf32> -> vector<2x64xf32>
    %66 = arith.addf %64, %65 : vector<2x64xf32>
    %67 = vector.extract_strided_slice %66 {offsets = [0, 0], sizes = [2, 48], strides = [1, 1]} : vector<2x64xf32> to vector<2x48xf32>
    %68 = arith.negf %67 : vector<2x48xf32>
    %69 = math.exp %68 : vector<2x48xf32>
    %cst_23 = arith.constant 1.000000e+00 : f32
    %70 = vector.broadcast %cst_23 : f32 to vector<2x48xf32>
    %71 = arith.addf %70, %69 : vector<2x48xf32>
    %72 = arith.divf %70, %71 : vector<2x48xf32>
    %73 = vector.extract_strided_slice %66 {offsets = [0, 48], sizes = [2, 16], strides = [1, 1]} : vector<2x64xf32> to vector<2x16xf32>
    %74 = math.tanh %73 : vector<2x16xf32>
    %75 = vector.extract_strided_slice %72 {offsets = [0, 0], sizes = [2, 16], strides = [1, 1]} : vector<2x48xf32> to vector<2x16xf32>
    %76 = vector.extract_strided_slice %72 {offsets = [0, 16], sizes = [2, 16], strides = [1, 1]} : vector<2x48xf32> to vector<2x16xf32>
    %77 = vector.extract_strided_slice %72 {offsets = [0, 32], sizes = [2, 16], strides = [1, 1]} : vector<2x48xf32> to vector<2x16xf32>
    %78 = arith.mulf %76, %60 : vector<2x16xf32>
    %79 = arith.mulf %75, %74 : vector<2x16xf32>
    %80 = arith.addf %78, %79 : vector<2x16xf32>
    %81 = math.tanh %80 : vector<2x16xf32>
    %82 = arith.mulf %77, %81 : vector<2x16xf32>
    %83 = vector.extract_strided_slice %20 {offsets = [0, 3, 0], sizes = [2, 1, 64], strides = [1, 1, 1]} : vector<2x8x64xf32> to vector<2x1x64xf32>
    %84 = vector.shape_cast %83 : vector<2x1x64xf32> to vector<2x64xf32>
    %cst_24 = arith.constant dense<0.000000e+00> : vector<2x64xf32>
    %85 = tpu.matmul %82, %15, %cst_24 {dimension_numbers = #tpu.dot_dimension_numbers<[1], [0], [0], [1], [0, 0, 1, 1], [], []>} : vector<2x16xf32>, vector<16x64xf32>, vector<2x64xf32> -> vector<2x64xf32>
    %86 = arith.addf %84, %85 : vector<2x64xf32>
    %87 = vector.extract_strided_slice %86 {offsets = [0, 0], sizes = [2, 48], strides = [1, 1]} : vector<2x64xf32> to vector<2x48xf32>
    %88 = arith.negf %87 : vector<2x48xf32>
    %89 = math.exp %88 : vector<2x48xf32>
    %cst_25 = arith.constant 1.000000e+00 : f32
    %90 = vector.broadcast %cst_25 : f32 to vector<2x48xf32>
    %91 = arith.addf %90, %89 : vector<2x48xf32>
    %92 = arith.divf %90, %91 : vector<2x48xf32>
    %93 = vector.extract_strided_slice %86 {offsets = [0, 48], sizes = [2, 16], strides = [1, 1]} : vector<2x64xf32> to vector<2x16xf32>
    %94 = math.tanh %93 : vector<2x16xf32>
    %95 = vector.extract_strided_slice %92 {offsets = [0, 0], sizes = [2, 16], strides = [1, 1]} : vector<2x48xf32> to vector<2x16xf32>
    %96 = vector.extract_strided_slice %92 {offsets = [0, 16], sizes = [2, 16], strides = [1, 1]} : vector<2x48xf32> to vector<2x16xf32>
    %97 = vector.extract_strided_slice %92 {offsets = [0, 32], sizes = [2, 16], strides = [1, 1]} : vector<2x48xf32> to vector<2x16xf32>
    %98 = arith.mulf %96, %80 : vector<2x16xf32>
    %99 = arith.mulf %95, %94 : vector<2x16xf32>
    %100 = arith.addf %98, %99 : vector<2x16xf32>
    %101 = math.tanh %100 : vector<2x16xf32>
    %102 = arith.mulf %97, %101 : vector<2x16xf32>
    %103 = vector.extract_strided_slice %20 {offsets = [0, 4, 0], sizes = [2, 1, 64], strides = [1, 1, 1]} : vector<2x8x64xf32> to vector<2x1x64xf32>
    %104 = vector.shape_cast %103 : vector<2x1x64xf32> to vector<2x64xf32>
    %cst_26 = arith.constant dense<0.000000e+00> : vector<2x64xf32>
    %105 = tpu.matmul %102, %15, %cst_26 {dimension_numbers = #tpu.dot_dimension_numbers<[1], [0], [0], [1], [0, 0, 1, 1], [], []>} : vector<2x16xf32>, vector<16x64xf32>, vector<2x64xf32> -> vector<2x64xf32>
    %106 = arith.addf %104, %105 : vector<2x64xf32>
    %107 = vector.extract_strided_slice %106 {offsets = [0, 0], sizes = [2, 48], strides = [1, 1]} : vector<2x64xf32> to vector<2x48xf32>
    %108 = arith.negf %107 : vector<2x48xf32>
    %109 = math.exp %108 : vector<2x48xf32>
    %cst_27 = arith.constant 1.000000e+00 : f32
    %110 = vector.broadcast %cst_27 : f32 to vector<2x48xf32>
    %111 = arith.addf %110, %109 : vector<2x48xf32>
    %112 = arith.divf %110, %111 : vector<2x48xf32>
    %113 = vector.extract_strided_slice %106 {offsets = [0, 48], sizes = [2, 16], strides = [1, 1]} : vector<2x64xf32> to vector<2x16xf32>
    %114 = math.tanh %113 : vector<2x16xf32>
    %115 = vector.extract_strided_slice %112 {offsets = [0, 0], sizes = [2, 16], strides = [1, 1]} : vector<2x48xf32> to vector<2x16xf32>
    %116 = vector.extract_strided_slice %112 {offsets = [0, 16], sizes = [2, 16], strides = [1, 1]} : vector<2x48xf32> to vector<2x16xf32>
    %117 = vector.extract_strided_slice %112 {offsets = [0, 32], sizes = [2, 16], strides = [1, 1]} : vector<2x48xf32> to vector<2x16xf32>
    %118 = arith.mulf %116, %100 : vector<2x16xf32>
    %119 = arith.mulf %115, %114 : vector<2x16xf32>
    %120 = arith.addf %118, %119 : vector<2x16xf32>
    %121 = math.tanh %120 : vector<2x16xf32>
    %122 = arith.mulf %117, %121 : vector<2x16xf32>
    %123 = vector.extract_strided_slice %20 {offsets = [0, 5, 0], sizes = [2, 1, 64], strides = [1, 1, 1]} : vector<2x8x64xf32> to vector<2x1x64xf32>
    %124 = vector.shape_cast %123 : vector<2x1x64xf32> to vector<2x64xf32>
    %cst_28 = arith.constant dense<0.000000e+00> : vector<2x64xf32>
    %125 = tpu.matmul %122, %15, %cst_28 {dimension_numbers = #tpu.dot_dimension_numbers<[1], [0], [0], [1], [0, 0, 1, 1], [], []>} : vector<2x16xf32>, vector<16x64xf32>, vector<2x64xf32> -> vector<2x64xf32>
    %126 = arith.addf %124, %125 : vector<2x64xf32>
    %127 = vector.extract_strided_slice %126 {offsets = [0, 0], sizes = [2, 48], strides = [1, 1]} : vector<2x64xf32> to vector<2x48xf32>
    %128 = arith.negf %127 : vector<2x48xf32>
    %129 = math.exp %128 : vector<2x48xf32>
    %cst_29 = arith.constant 1.000000e+00 : f32
    %130 = vector.broadcast %cst_29 : f32 to vector<2x48xf32>
    %131 = arith.addf %130, %129 : vector<2x48xf32>
    %132 = arith.divf %130, %131 : vector<2x48xf32>
    %133 = vector.extract_strided_slice %126 {offsets = [0, 48], sizes = [2, 16], strides = [1, 1]} : vector<2x64xf32> to vector<2x16xf32>
    %134 = math.tanh %133 : vector<2x16xf32>
    %135 = vector.extract_strided_slice %132 {offsets = [0, 0], sizes = [2, 16], strides = [1, 1]} : vector<2x48xf32> to vector<2x16xf32>
    %136 = vector.extract_strided_slice %132 {offsets = [0, 16], sizes = [2, 16], strides = [1, 1]} : vector<2x48xf32> to vector<2x16xf32>
    %137 = vector.extract_strided_slice %132 {offsets = [0, 32], sizes = [2, 16], strides = [1, 1]} : vector<2x48xf32> to vector<2x16xf32>
    %138 = arith.mulf %136, %120 : vector<2x16xf32>
    %139 = arith.mulf %135, %134 : vector<2x16xf32>
    %140 = arith.addf %138, %139 : vector<2x16xf32>
    %141 = math.tanh %140 : vector<2x16xf32>
    %142 = arith.mulf %137, %141 : vector<2x16xf32>
    %143 = vector.extract_strided_slice %20 {offsets = [0, 6, 0], sizes = [2, 1, 64], strides = [1, 1, 1]} : vector<2x8x64xf32> to vector<2x1x64xf32>
    %144 = vector.shape_cast %143 : vector<2x1x64xf32> to vector<2x64xf32>
    %cst_30 = arith.constant dense<0.000000e+00> : vector<2x64xf32>
    %145 = tpu.matmul %142, %15, %cst_30 {dimension_numbers = #tpu.dot_dimension_numbers<[1], [0], [0], [1], [0, 0, 1, 1], [], []>} : vector<2x16xf32>, vector<16x64xf32>, vector<2x64xf32> -> vector<2x64xf32>
    %146 = arith.addf %144, %145 : vector<2x64xf32>
    %147 = vector.extract_strided_slice %146 {offsets = [0, 0], sizes = [2, 48], strides = [1, 1]} : vector<2x64xf32> to vector<2x48xf32>
    %148 = arith.negf %147 : vector<2x48xf32>
    %149 = math.exp %148 : vector<2x48xf32>
    %cst_31 = arith.constant 1.000000e+00 : f32
    %150 = vector.broadcast %cst_31 : f32 to vector<2x48xf32>
    %151 = arith.addf %150, %149 : vector<2x48xf32>
    %152 = arith.divf %150, %151 : vector<2x48xf32>
    %153 = vector.extract_strided_slice %146 {offsets = [0, 48], sizes = [2, 16], strides = [1, 1]} : vector<2x64xf32> to vector<2x16xf32>
    %154 = math.tanh %153 : vector<2x16xf32>
    %155 = vector.extract_strided_slice %152 {offsets = [0, 0], sizes = [2, 16], strides = [1, 1]} : vector<2x48xf32> to vector<2x16xf32>
    %156 = vector.extract_strided_slice %152 {offsets = [0, 16], sizes = [2, 16], strides = [1, 1]} : vector<2x48xf32> to vector<2x16xf32>
    %157 = vector.extract_strided_slice %152 {offsets = [0, 32], sizes = [2, 16], strides = [1, 1]} : vector<2x48xf32> to vector<2x16xf32>
    %158 = arith.mulf %156, %140 : vector<2x16xf32>
    %159 = arith.mulf %155, %154 : vector<2x16xf32>
    %160 = arith.addf %158, %159 : vector<2x16xf32>
    %161 = math.tanh %160 : vector<2x16xf32>
    %162 = arith.mulf %157, %161 : vector<2x16xf32>
    %163 = vector.extract_strided_slice %20 {offsets = [0, 7, 0], sizes = [2, 1, 64], strides = [1, 1, 1]} : vector<2x8x64xf32> to vector<2x1x64xf32>
    %164 = vector.shape_cast %163 : vector<2x1x64xf32> to vector<2x64xf32>
    %cst_32 = arith.constant dense<0.000000e+00> : vector<2x64xf32>
    %165 = tpu.matmul %162, %15, %cst_32 {dimension_numbers = #tpu.dot_dimension_numbers<[1], [0], [0], [1], [0, 0, 1, 1], [], []>} : vector<2x16xf32>, vector<16x64xf32>, vector<2x64xf32> -> vector<2x64xf32>
    %166 = arith.addf %164, %165 : vector<2x64xf32>
    %167 = vector.extract_strided_slice %166 {offsets = [0, 0], sizes = [2, 48], strides = [1, 1]} : vector<2x64xf32> to vector<2x48xf32>
    %168 = arith.negf %167 : vector<2x48xf32>
    %169 = math.exp %168 : vector<2x48xf32>
    %cst_33 = arith.constant 1.000000e+00 : f32
    %170 = vector.broadcast %cst_33 : f32 to vector<2x48xf32>
    %171 = arith.addf %170, %169 : vector<2x48xf32>
    %172 = arith.divf %170, %171 : vector<2x48xf32>
    %173 = vector.extract_strided_slice %166 {offsets = [0, 48], sizes = [2, 16], strides = [1, 1]} : vector<2x64xf32> to vector<2x16xf32>
    %174 = math.tanh %173 : vector<2x16xf32>
    %175 = vector.extract_strided_slice %172 {offsets = [0, 0], sizes = [2, 16], strides = [1, 1]} : vector<2x48xf32> to vector<2x16xf32>
    %176 = vector.extract_strided_slice %172 {offsets = [0, 16], sizes = [2, 16], strides = [1, 1]} : vector<2x48xf32> to vector<2x16xf32>
    %177 = vector.extract_strided_slice %172 {offsets = [0, 32], sizes = [2, 16], strides = [1, 1]} : vector<2x48xf32> to vector<2x16xf32>
    %178 = arith.mulf %176, %160 : vector<2x16xf32>
    %179 = arith.mulf %175, %174 : vector<2x16xf32>
    %180 = arith.addf %178, %179 : vector<2x16xf32>
    %181 = math.tanh %180 : vector<2x16xf32>
    %182 = arith.mulf %177, %181 : vector<2x16xf32>
    %183 = tpu.concatenate %42, %62, %82, %102, %122, %142, %162, %182 in 1 : vector<2x16xf32>, vector<2x16xf32>, vector<2x16xf32>, vector<2x16xf32>, vector<2x16xf32>, vector<2x16xf32>, vector<2x16xf32>, vector<2x16xf32> -> vector<2x128xf32>
    %c0_34 = arith.constant 0 : index
    %c0_35 = arith.constant 0 : index
    %184 = vector.load %arg6[%c0_34, %c0_35] : memref<128x16xf32, #tpu.memory_space<vmem>>, vector<128x16xf32>
    %cst_36 = arith.constant dense<0.000000e+00> : vector<2x16xf32>
    %185 = tpu.matmul %183, %184, %cst_36 {dimension_numbers = #tpu.dot_dimension_numbers<[1], [0], [0], [1], [0, 0, 1, 1], [], []>} : vector<2x128xf32>, vector<128x16xf32>, vector<2x16xf32> -> vector<2x16xf32>
    %c0_37 = arith.constant 0 : index
    %c0_38 = arith.constant 0 : index
    %186 = vector.load %arg7[%c0_37, %c0_38] : memref<1x16xf32, #tpu.memory_space<vmem>>, vector<1x16xf32>
    %187 = vector.broadcast %186 : vector<1x16xf32> to vector<2x16xf32>
    %188 = arith.addf %185, %187 : vector<2x16xf32>
    %cst_39 = arith.constant 0.000000e+00 : f32
    %189 = vector.broadcast %cst_39 : f32 to vector<2x16xf32>
    %190 = arith.cmpf oge, %188, %189 : vector<2x16xf32>
    %cst_40 = arith.constant 0.899999976 : f32
    %191 = vector.broadcast %cst_40 : f32 to vector<2x16xf32>
    %192 = arith.mulf %191, %188 : vector<2x16xf32>
    %193 = arith.select %190, %188, %192 : vector<2x16xi1>, vector<2x16xf32>
    %c0_41 = arith.constant 0 : index
    %c0_42 = arith.constant 0 : index
    %194 = vector.load %arg8[%c0_41, %c0_42] : memref<16x8xf32, #tpu.memory_space<vmem>>, vector<16x8xf32>
    %cst_43 = arith.constant dense<0.000000e+00> : vector<2x8xf32>
    %195 = tpu.matmul %193, %194, %cst_43 {dimension_numbers = #tpu.dot_dimension_numbers<[1], [0], [0], [1], [0, 0, 1, 1], [], []>} : vector<2x16xf32>, vector<16x8xf32>, vector<2x8xf32> -> vector<2x8xf32>
    %c0_44 = arith.constant 0 : index
    %c0_45 = arith.constant 0 : index
    %196 = vector.load %arg9[%c0_44, %c0_45] : memref<1x8xf32, #tpu.memory_space<vmem>>, vector<1x8xf32>
    %197 = vector.broadcast %196 : vector<1x8xf32> to vector<2x8xf32>
    %198 = arith.addf %195, %197 : vector<2x8xf32>
    %cst_46 = arith.constant 0.000000e+00 : f32
    %199 = vector.broadcast %cst_46 : f32 to vector<2x8xf32>
    %200 = arith.cmpf oge, %198, %199 : vector<2x8xf32>
    %cst_47 = arith.constant 0.899999976 : f32
    %201 = vector.broadcast %cst_47 : f32 to vector<2x8xf32>
    %202 = arith.mulf %201, %198 : vector<2x8xf32>
    %203 = arith.select %200, %198, %202 : vector<2x8xi1>, vector<2x8xf32>
    %cst_48 = arith.constant dense<0xFF800000> : vector<2xf32>
    %204 = vector.multi_reduction <maximumf>, %203, %cst_48 [1] : vector<2x8xf32> to vector<2xf32>
    %205 = vector.shape_cast %204 : vector<2xf32> to vector<2x1xf32>
    %206 = vector.broadcast %205 : vector<2x1xf32> to vector<2x8xf32>
    %207 = arith.subf %203, %206 : vector<2x8xf32>
    %208 = math.exp %207 : vector<2x8xf32>
    %cst_49 = arith.constant dense<0.000000e+00> : vector<2xf32>
    %209 = vector.multi_reduction <add>, %208, %cst_49 [1] : vector<2x8xf32> to vector<2xf32>
    %210 = vector.shape_cast %209 : vector<2xf32> to vector<2x1xf32>
    %211 = math.log %210 : vector<2x1xf32>
    %212 = vector.broadcast %211 : vector<2x1xf32> to vector<2x8xf32>
    %213 = arith.subf %207, %212 : vector<2x8xf32>
    %214 = vector.shape_cast %213 : vector<2x8xf32> to vector<2x1x8xf32>
    %c0_50 = arith.constant 0 : index
    %c0_51 = arith.constant 0 : index
    %c0_52 = arith.constant 0 : index
    %215 = vector.load %arg10[%c0_50, %c0_51, %c0_52] : memref<2x1x8xf32, #tpu.memory_space<vmem>>, vector<2x1x8xf32>
    tpu.vector_store %arg10[%c0_50, %c0_51, %c0_52], %214 {strides = array<i32>} : memref<2x1x8xf32, #tpu.memory_space<vmem>>, vector<2x1x8xf32>,
    return
  }
}

</mosaic_0001>

<llo_original>
// kernel: tpu_custom_call.1
$region0: #{tpu_custom_call.1}
  #allocation0 [shape = 'u32[]', space=smem, size = 0x4, offset = 0x4, fixed_abs, tag = 'smem constant byte address 0x4 - core index']
  #allocation1 [shape = 'u32[72,128]{1,0:T(1,128)}', space=vmem, size = 0x9000, scoped, tag = 'internal scratch']
  %s0 = inlined_call_operand.vmem [shape: f32[2,16,12], index: 0, kind: input, shape index: {}]
  %s1 = inlined_call_operand.vmem [shape: f32[12,32], index: 1, kind: input, shape index: {}]
  %s2 = inlined_call_operand.vmem [shape: f32[1,32], index: 2, kind: input, shape index: {}]
  %s3 = inlined_call_operand.vmem [shape: f32[32,64], index: 3, kind: input, shape index: {}]
  %s4 = inlined_call_operand.vmem [shape: f32[16,64], index: 4, kind: input, shape index: {}]
  %s5 = inlined_call_operand.vmem [shape: f32[1,64], index: 5, kind: input, shape index: {}]
  %s6 = inlined_call_operand.vmem [shape: f32[128,16], index: 6, kind: input, shape index: {}]
  %s7 = inlined_call_operand.vmem [shape: f32[1,16], index: 7, kind: input, shape index: {}]
  %s8 = inlined_call_operand.vmem [shape: f32[16,8], index: 8, kind: input, shape index: {}]
  %s9 = inlined_call_operand.vmem [shape: f32[1,8], index: 9, kind: input, shape index: {}]
  %s10 = inlined_call_operand.hbm [shape: f32[2,1,8], index: 10, kind: output, shape index: {}]
  %s11 = sld [smem:[#allocation0]]
  $region50: #{tpu_custom_call.1} parent=0
    _
  %s13 = ssub.s32 1, %s11
  %s14 = scalar_select 0, %s13, %s11
  $region1: #{tpu_custom_call.1} parent=0
    #allocation2 [shape = 'u8[1024]{0}', space=vmem, size = 0x400, scoped, tag = 'output window, operand 0, single buffered']
    #allocation3 [shape = 's32[1]{0}', space=sflag, size = 0x4, scoped, tag = 'scoped memory for tpu_custom_call.1']
    %15 = vsyncpa [#allocation3], 0
    // Predicated region
    $region2: #{tpu_custom_call.1} parent=1 // pred_check
      _
    $region3: #{tpu_custom_call.1} parent=1 // pred_check_branch
      %17 = sbr.rel (0) target = $region5
    $region4: #{tpu_custom_call.1} parent=1 // pred_region
      _
    $region5: #{tpu_custom_call.1} parent=1 // pred_fallthru
      _
    // Predicated region
    $region6: #{tpu_custom_call.1} parent=1 // pred_check
      _
    $region7: #{tpu_custom_call.1} parent=1 // pred_check_branch
      %19 = sbr.rel (0) target = $region9
    $region8: #{tpu_custom_call.1} parent=1 // pred_region
      _
    $region9: #{tpu_custom_call.1} parent=1 // pred_fallthru
      _
    // Predicated region
    $region10: #{tpu_custom_call.1} parent=1 // pred_check
      _
    $region11: #{tpu_custom_call.1} parent=1 // pred_check_branch
      %21 = sbr.rel (0) target = $region13
    $region12: #{tpu_custom_call.1} parent=1 // pred_region
      _
    $region13: #{tpu_custom_call.1} parent=1 // pred_fallthru
      _
    // Predicated region
    $region14: #{tpu_custom_call.1} parent=1 // pred_check
      _
    $region15: #{tpu_custom_call.1} parent=1 // pred_check_branch
      %23 = sbr.rel (0) target = $region17
    $region16: #{tpu_custom_call.1} parent=1 // pred_region
      _
    $region17: #{tpu_custom_call.1} parent=1 // pred_fallthru
      _
    // Predicated region
    $region18: #{tpu_custom_call.1} parent=1 // pred_check
      _
    $region19: #{tpu_custom_call.1} parent=1 // pred_check_branch
      %25 = sbr.rel (0) target = $region21
    $region20: #{tpu_custom_call.1} parent=1 // pred_region
      _
    $region21: #{tpu_custom_call.1} parent=1 // pred_fallthru
      _
    // Predicated region
    $region22: #{tpu_custom_call.1} parent=1 // pred_check
      _
    $region23: #{tpu_custom_call.1} parent=1 // pred_check_branch
      %27 = sbr.rel (0) target = $region25
    $region24: #{tpu_custom_call.1} parent=1 // pred_region
      _
    $region25: #{tpu_custom_call.1} parent=1 // pred_fallthru
      _
    // Predicated region
    $region26: #{tpu_custom_call.1} parent=1 // pred_check
      _
    $region27: #{tpu_custom_call.1} parent=1 // pred_check_branch
      %29 = sbr.rel (0) target = $region29
    $region28: #{tpu_custom_call.1} parent=1 // pred_region
      _
    $region29: #{tpu_custom_call.1} parent=1 // pred_fallthru
      _
    // Predicated region
    $region30: #{tpu_custom_call.1} parent=1 // pred_check
      _
    $region31: #{tpu_custom_call.1} parent=1 // pred_check_branch
      %31 = sbr.rel (0) target = $region33
    $region32: #{tpu_custom_call.1} parent=1 // pred_region
      _
    $region33: #{tpu_custom_call.1} parent=1 // pred_fallthru
      _
    // Predicated region
    $region34: #{tpu_custom_call.1} parent=1 // pred_check
      _
    $region35: #{tpu_custom_call.1} parent=1 // pred_check_branch
      %33 = sbr.rel (0) target = $region37
    $region36: #{tpu_custom_call.1} parent=1 // pred_region
      _
    $region37: #{tpu_custom_call.1} parent=1 // pred_fallthru
      _
    // Predicated region
    $region38: #{tpu_custom_call.1} parent=1 // pred_check
      _
    $region39: #{tpu_custom_call.1} parent=1 // pred_check_branch
      %35 = sbr.rel (0) target = $region41
    $region40: #{tpu_custom_call.1} parent=1 // pred_region
      _
    $region41: #{tpu_custom_call.1} parent=1 // pred_fallthru
      _
    %v36 = vld [vmem:[%s0] sm:$0xff]
    %v37 = vld [vmem:[%s0 + $0x8] sm:$0xff]
    %v38 = vld [vmem:[%s0 + $0x10] sm:$0xff]
    %v39 = vld [vmem:[%s0 + $0x18] sm:$0xff]
    %v40 = vld [vmem:[%s1] sm:$0xff]
    %v41 = vld [vmem:[%s1 + $0x8] sm:$0xf]
    %v42 = vld [vmem:[%s2] sm:$0x1]
    %v44 = vperm.slane %v42, 0
    %vm46 = vcmask 97280
    %v48 = vsel %vm46, %v36, 0
    %v51 = vsel %vm46, %v37, 0
    %v54 = vsel %vm46, %v38, 0
    %v57 = vsel %vm46, %v39, 0
    %vm59 = vcmask 1043456
    %v61 = vsel %vm59, %v41, 0
    %63 = vmatpush.msra.mxu0 0.0
    %64 = vmatpush.msra.mxu0 0.0
    %65 = vmatpush.msra.mxu0 0.0
    %66 = vmatpush.msra.mxu0 0.0
    %67 = vmatpush.msra.mxu0 0.0
    %68 = vmatpush.msra.mxu0 0.0
    %69 = vmatpush.msra.mxu0 0.0
    %70 = vmatpush.msra.mxu0 0.0
    %71 = vmatpush.msra.mxu0 0.0
    %72 = vmatpush.msra.mxu0 0.0
    %73 = vmatpush.msra.mxu0 0.0
    %74 = vmatpush.msra.mxu0 0.0
    %75 = vmatpush.msra.mxu0 0.0
    %76 = vmatpush.msra.mxu0 0.0
    %77 = vmatpush.msra.mxu0 %v61
    %78 = vmatpush.msra.mxu0 %v40
    %79 = vmatmul.f32.gmra.mxu0 %v48
    %v80 = vpop.f32.mrf.mxu0
    %v81 = vadd.f32 %v44, %v80
    %82 = vmatmul.f32.gmra.mxu0 %v51
    %v83 = vpop.f32.mrf.mxu0
    %v84 = vadd.f32 %v44, %v83
    %85 = vmatmul.f32.gmra.mxu0 %v54
    %v86 = vpop.f32.mrf.mxu0
    %v87 = vadd.f32 %v44, %v86
    %88 = vmatmul.f32.gmra.mxu0 %v57
    %v89 = vpop.f32.mrf.mxu0
    %v90 = vadd.f32 %v44, %v89
    %91 = vdwg.mxu0
    %vm92 = vcmp.ge.f32.partialorder %v81, 0.0
    %vm93 = vcmp.ge.f32.partialorder %v84, 0.0
    %vm94 = vcmp.ge.f32.partialorder %v87, 0.0
    %vm95 = vcmp.ge.f32.partialorder %v90, 0.0
    %v96 = vmul.f32 %v81, 0.9
    %v97 = vmul.f32 %v84, 0.9
    %v98 = vmul.f32 %v87, 0.9
    %v99 = vmul.f32 %v90, 0.9
    %v100 = vsel %vm92, %v81, %v96
    %v101 = vsel %vm93, %v84, %v97
    %v102 = vsel %vm94, %v87, %v98
    %v103 = vsel %vm95, %v90, %v99
    %v108 = vrot.slane %v100, 2
    %v109 = vrot.slane %v100, 4
    %v110 = vrot.slane %v100, 6
    %v111 = vrot.slane %v101, 2
    %v112 = vrot.slane %v101, 4
    %v113 = vrot.slane %v101, 6
    %v114 = vrot.slane %v102, 2
    %v115 = vrot.slane %v102, 4
    %v116 = vrot.slane %v102, 6
    %v117 = vrot.slane %v103, 2
    %v118 = vrot.slane %v103, 4
    %v119 = vrot.slane %v103, 6
    %vm132 = vcmask 254976
    %v133 = vsel %vm132, %v100, -inf
    %v134 = vrot.slane %v133, 4
    %v135 = vmax.f32 %v133, %v134
    %v136 = vrot.slane %v135, 2
    %v137 = vmax.f32 %v135, %v136
    %v138 = vrot.slane %v137, 1
    %v139 = vmax.f32 %v137, %v138
    %v140 = vsel %vm132, %v108, -inf
    %v141 = vrot.slane %v140, 4
    %v142 = vmax.f32 %v140, %v141
    %v143 = vrot.slane %v142, 2
    %v144 = vmax.f32 %v142, %v143
    %v145 = vrot.slane %v144, 1
    %v146 = vmax.f32 %v144, %v145
    %v147 = vsel %vm132, %v109, -inf
    %v148 = vrot.slane %v147, 4
    %v149 = vmax.f32 %v147, %v148
    %v150 = vrot.slane %v149, 2
    %v151 = vmax.f32 %v149, %v150
    %v152 = vrot.slane %v151, 1
    %v153 = vmax.f32 %v151, %v152
    %v154 = vsel %vm132, %v110, -inf
    %v155 = vrot.slane %v154, 4
    %v156 = vmax.f32 %v154, %v155
    %v157 = vrot.slane %v156, 2
    %v158 = vmax.f32 %v156, %v157
    %v159 = vrot.slane %v158, 1
    %v160 = vmax.f32 %v158, %v159
    %v161 = vsel %vm132, %v101, -inf
    %v162 = vrot.slane %v161, 4
    %v163 = vmax.f32 %v161, %v162
    %v164 = vrot.slane %v163, 2
    %v165 = vmax.f32 %v163, %v164
    %v166 = vrot.slane %v165, 1
    %v167 = vmax.f32 %v165, %v166
    %v168 = vsel %vm132, %v111, -inf
    %v169 = vrot.slane %v168, 4
    %v170 = vmax.f32 %v168, %v169
    %v171 = vrot.slane %v170, 2
    %v172 = vmax.f32 %v170, %v171
    %v173 = vrot.slane %v172, 1
    %v174 = vmax.f32 %v172, %v173
    %v175 = vsel %vm132, %v112, -inf
    %v176 = vrot.slane %v175, 4
    %v177 = vmax.f32 %v175, %v176
    %v178 = vrot.slane %v177, 2
    %v179 = vmax.f32 %v177, %v178
    %v180 = vrot.slane %v179, 1
    %v181 = vmax.f32 %v179, %v180
    %v182 = vsel %vm132, %v113, -inf
    %v183 = vrot.slane %v182, 4
    %v184 = vmax.f32 %v182, %v183
    %v185 = vrot.slane %v184, 2
    %v186 = vmax.f32 %v184, %v185
    %v187 = vrot.slane %v186, 1
    %v188 = vmax.f32 %v186, %v187
    %v189 = vsel %vm132, %v102, -inf
    %v190 = vrot.slane %v189, 4
    %v191 = vmax.f32 %v189, %v190
    %v192 = vrot.slane %v191, 2
    %v193 = vmax.f32 %v191, %v192
    %v194 = vrot.slane %v193, 1
    %v195 = vmax.f32 %v193, %v194
    %v196 = vsel %vm132, %v114, -inf
    %v197 = vrot.slane %v196, 4
    %v198 = vmax.f32 %v196, %v197
    %v199 = vrot.slane %v198, 2
    %v200 = vmax.f32 %v198, %v199
    %v201 = vrot.slane %v200, 1
    %v202 = vmax.f32 %v200, %v201
    %v203 = vsel %vm132, %v115, -inf
    %v204 = vrot.slane %v203, 4
    %v205 = vmax.f32 %v203, %v204
    %v206 = vrot.slane %v205, 2
    %v207 = vmax.f32 %v205, %v206
    %v208 = vrot.slane %v207, 1
    %v209 = vmax.f32 %v207, %v208
    %v210 = vsel %vm132, %v116, -inf
    %v211 = vrot.slane %v210, 4
    %v212 = vmax.f32 %v210, %v211
    %v213 = vrot.slane %v212, 2
    %v214 = vmax.f32 %v212, %v213
    %v215 = vrot.slane %v214, 1
    %v216 = vmax.f32 %v214, %v215
    %v217 = vsel %vm132, %v103, -inf
    %v218 = vrot.slane %v217, 4
    %v219 = vmax.f32 %v217, %v218
    %v220 = vrot.slane %v219, 2
    %v221 = vmax.f32 %v219, %v220
    %v222 = vrot.slane %v221, 1
    %v223 = vmax.f32 %v221, %v222
    %v224 = vsel %vm132, %v117, -inf
    %v225 = vrot.slane %v224, 4
    %v226 = vmax.f32 %v224, %v225
    %v227 = vrot.slane %v226, 2
    %v228 = vmax.f32 %v226, %v227
    %v229 = vrot.slane %v228, 1
    %v230 = vmax.f32 %v228, %v229
    %v231 = vsel %vm132, %v118, -inf
    %v232 = vrot.slane %v231, 4
    %v233 = vmax.f32 %v231, %v232
    %v234 = vrot.slane %v233, 2
    %v235 = vmax.f32 %v233, %v234
    %v236 = vrot.slane %v235, 1
    %v237 = vmax.f32 %v235, %v236
    %v238 = vsel %vm132, %v119, -inf
    %v239 = vrot.slane %v238, 4
    %v240 = vmax.f32 %v238, %v239
    %v241 = vrot.slane %v240, 2
    %v242 = vmax.f32 %v240, %v241
    %v243 = vrot.slane %v242, 1
    %v244 = vmax.f32 %v242, %v243
    %v245 = vld [vmem:[%s3] sm:$0xff]
    %v246 = vld [vmem:[%s3 + $0x8] sm:$0xff]
    %v247 = vld [vmem:[%s3 + $0x10] sm:$0xff]
    %v248 = vld [vmem:[%s3 + $0x18] sm:$0xff]
    %v249 = vld [vmem:[%s4] sm:$0xff]
    %v250 = vld [vmem:[%s4 + $0x8] sm:$0xff]
    %v251 = vld [vmem:[%s5] sm:$0x1]
    %v253 = vperm.slane %v251, 0
    %vm271 = vcmask 1041409
    %v272 = vsel %vm271, %v146, %v139
    %vm273 = vcmask 1042434
    %v274 = vsel %vm273, %v153, %v272
    %vm275 = vcmask 1043459
    %v276 = vsel %vm275, %v160, %v274
    %vm277 = vcmask 1044484
    %v278 = vsel %vm277, %v167, %v276
    %vm279 = vcmask 1045509
    %v280 = vsel %vm279, %v174, %v278
    %vm281 = vcmask 1046534
    %v282 = vsel %vm281, %v181, %v280
    %vm283 = vcmask 1047559
    %v284 = vsel %vm283, %v188, %v282
    %v285 = vsel %vm271, %v202, %v195
    %v286 = vsel %vm273, %v209, %v285
    %v287 = vsel %vm275, %v216, %v286
    %v288 = vsel %vm277, %v223, %v287
    %v289 = vsel %vm279, %v230, %v288
    %v290 = vsel %vm281, %v237, %v289
    %v291 = vsel %vm283, %v244, %v290
    %vm292 = vcmask 261120
    %v293 = vsel %vm292, %v284, 0
    %v295 = vsel %vm292, %v291, 0
    %297 = vmatpush.msra.mxu0 0.0
    %298 = vmatpush.msra.mxu0 0.0
    %299 = vmatpush.msra.mxu0 0.0
    %300 = vmatpush.msra.mxu0 0.0
    %301 = vmatpush.msra.mxu0 0.0
    %302 = vmatpush.msra.mxu0 0.0
    %303 = vmatpush.msra.mxu0 0.0
    %304 = vmatpush.msra.mxu0 0.0
    %305 = vmatpush.msra.mxu0 0.0
    %306 = vmatpush.msra.mxu0 0.0
    %307 = vmatpush.msra.mxu0 0.0
    %308 = vmatpush.msra.mxu0 0.0
    %309 = vmatpush.msra.mxu0 %v248
    %310 = vmatpush.msra.mxu0 %v247
    %311 = vmatpush.msra.mxu0 %v246
    %312 = vmatpush.msra.mxu0 %v245
    %313 = vmatmul.f32.gmra.mxu0 %v293
    %v314 = vpop.f32.mrf.mxu0
    %v315 = vadd.f32 %v253, %v314
    %316 = vmatmul.f32.gmra.mxu0 %v295
    %v317 = vpop.f32.mrf.mxu0
    %v318 = vadd.f32 %v253, %v317
    %319 = vdwg.mxu0
    %vm320 = vcmask 130048
    %v322 = vsel %vm320, 0.0, 0
    %324 = vmatpush.msra.mxu0 0.0
    %325 = vmatpush.msra.mxu0 0.0
    %326 = vmatpush.msra.mxu0 0.0
    %327 = vmatpush.msra.mxu0 0.0
    %328 = vmatpush.msra.mxu0 0.0
    %329 = vmatpush.msra.mxu0 0.0
    %330 = vmatpush.msra.mxu0 0.0
    %331 = vmatpush.msra.mxu0 0.0
    %332 = vmatpush.msra.mxu0 0.0
    %333 = vmatpush.msra.mxu0 0.0
    %334 = vmatpush.msra.mxu0 0.0
    %335 = vmatpush.msra.mxu0 0.0
    %336 = vmatpush.msra.mxu0 0.0
    %337 = vmatpush.msra.mxu0 0.0
    %338 = vmatpush.msra.mxu0 %v250
    %339 = vmatpush.msra.mxu0 %v249
    %340 = vmatmul.f32.gmra.mxu0 %v322
    %v341 = vpop.f32.mrf.mxu0
    %v342 = vadd.f32 0.0, %v341
    %343 = vdwg.mxu0
    %v345 = vrot.slane %v342, 1
    %v348 = vadd.f32 %v315, %v342
    %v349 = vadd.f32 %v318, %v345
    %v350 = vxor.u32 %v348, 2147483648
    %v351 = vxor.u32 %v349, 2147483648
    %v352 = vmul.f32 %v350, 1.442695
    %v353 = vpow.pop %v352
    %v354 = vmul.f32 %v351, 1.442695
    %v355 = vpow.pop %v354
    %v356 = vadd.f32 %v353, 1.0
    %v357 = vadd.f32 %v355, 1.0
    %v358 = vrcp.pop %v356
    %v359 = vmul.f32 %v356, %v358
    %v360 = vsub.f32 1.0, %v359
    %v361 = vmul.f32 %v358, %v360
    %v362 = vadd.f32 %v358, %v361
    %vm363 = vweird.f32 %v356
    %vm364 = vweird.f32 %v358
    %vm365 = vmor %vm363, %vm364
    %v366 = vsel %vm365, %v358, %v362
    %v367 = vand.u32 2147483647, %v356
    %vm368 = vcmp.eq.f32.partialorder %v367, 8.507059e+37
    %v369 = vand.u32 %v356, 2147483648
    %v370 = vor.u32 1.1754944e-38, %v369
    %v371 = vsel %vm368, %v370, %v366
    %v372 = vmul.f32 1.0, %v371
    %v373 = vrcp.pop %v357
    %v374 = vmul.f32 %v357, %v373
    %v375 = vsub.f32 1.0, %v374
    %v376 = vmul.f32 %v373, %v375
    %v377 = vadd.f32 %v373, %v376
    %vm378 = vweird.f32 %v357
    %vm379 = vweird.f32 %v373
    %vm380 = vmor %vm378, %vm379
    %v381 = vsel %vm380, %v373, %v377
    %v382 = vand.u32 2147483647, %v357
    %vm383 = vcmp.eq.f32.partialorder %v382, 8.507059e+37
    %v384 = vand.u32 %v357, 2147483648
    %v385 = vor.u32 1.1754944e-38, %v384
    %v386 = vsel %vm383, %v385, %v381
    %v387 = vmul.f32 1.0, %v386
    %v388 = vtanh.pop %v348
    %v389 = vtanh.pop %v349
    %v390 = vmul.f32 %v372, 0.0
    %v391 = vmul.f32 %v387, 0.0
    %394 = vrot.lane.b32.xlu0 %v388, 80
    %v395 = vpop.permute.xlu0 %394
    %396 = vrot.lane.b32.xlu0 %v389, 80
    %v397 = vpop.permute.xlu0 %396
    %v400 = vmul.f32 %v372, %v395
    %v401 = vmul.f32 %v387, %v397
    %404 = vrot.lane.b32.xlu0 %v400, 16
    %v405 = vpop.permute.xlu0 %404
    %406 = vrot.lane.b32.xlu0 %v401, 16
    %v407 = vpop.permute.xlu0 %406
    %v410 = vadd.f32 %v390, %v405
    %v411 = vadd.f32 %v391, %v407
    %v412 = vtanh.pop %v410
    %v413 = vtanh.pop %v411
    %416 = vrot.lane.b32.xlu0 %v412, 16
    %v417 = vpop.permute.xlu0 %416
    %418 = vrot.lane.b32.xlu0 %v413, 16
    %v419 = vpop.permute.xlu0 %418
    %v422 = vmul.f32 %v372, %v417
    %v423 = vmul.f32 %v387, %v419
    %v426 = vrot.slane %v423, 7
    %v427 = vsel %vm271, %v426, %v422
    %428 = vrot.lane.b32.xlu0 %v427, 96
    %v429 = vpop.permute.xlu0 %428
    %v430 = vsel %vm320, %v429, 0
    %432 = vmatpush.msra.mxu0 0.0
    %433 = vmatpush.msra.mxu0 0.0
    %434 = vmatpush.msra.mxu0 0.0
    %435 = vmatpush.msra.mxu0 0.0
    %436 = vmatpush.msra.mxu0 0.0
    %437 = vmatpush.msra.mxu0 0.0
    %438 = vmatpush.msra.mxu0 0.0
    %439 = vmatpush.msra.mxu0 0.0
    %440 = vmatpush.msra.mxu0 0.0
    %441 = vmatpush.msra.mxu0 0.0
    %442 = vmatpush.msra.mxu0 0.0
    %443 = vmatpush.msra.mxu0 0.0
    %444 = vmatpush.msra.mxu0 0.0
    %445 = vmatpush.msra.mxu0 0.0
    %446 = vmatpush.msra.mxu0 %v250
    %447 = vmatpush.msra.mxu0 %v249
    %448 = vmatmul.f32.gmra.mxu0 %v430
    %v449 = vpop.f32.mrf.mxu0
    %v450 = vadd.f32 0.0, %v449
    %451 = vdwg.mxu0
    %v453 = vrot.slane %v450, 7
    %v456 = vadd.f32 %v315, %v453
    %v457 = vadd.f32 %v318, %v450
    %v458 = vxor.u32 %v456, 2147483648
    %v459 = vxor.u32 %v457, 2147483648
    %v460 = vmul.f32 %v458, 1.442695
    %v461 = vpow.pop %v460
    %v462 = vmul.f32 %v459, 1.442695
    %v463 = vpow.pop %v462
    %v464 = vadd.f32 %v461, 1.0
    %v465 = vadd.f32 %v463, 1.0
    %v466 = vrcp.pop %v464
    %v467 = vmul.f32 %v464, %v466
    %v468 = vsub.f32 1.0, %v467
    %v469 = vmul.f32 %v466, %v468
    %v470 = vadd.f32 %v466, %v469
    %vm471 = vweird.f32 %v464
    %vm472 = vweird.f32 %v466
    %vm473 = vmor %vm471, %vm472
    %v474 = vsel %vm473, %v466, %v470
    %v475 = vand.u32 2147483647, %v464
    %vm476 = vcmp.eq.f32.partialorder %v475, 8.507059e+37
    %v477 = vand.u32 %v464, 2147483648
    %v478 = vor.u32 1.1754944e-38, %v477
    %v479 = vsel %vm476, %v478, %v474
    %v480 = vmul.f32 1.0, %v479
    %v481 = vrcp.pop %v465
    %v482 = vmul.f32 %v465, %v481
    %v483 = vsub.f32 1.0, %v482
    %v484 = vmul.f32 %v481, %v483
    %v485 = vadd.f32 %v481, %v484
    %vm486 = vweird.f32 %v465
    %vm487 = vweird.f32 %v481
    %vm488 = vmor %vm486, %vm487
    %v489 = vsel %vm488, %v481, %v485
    %v490 = vand.u32 2147483647, %v465
    %vm491 = vcmp.eq.f32.partialorder %v490, 8.507059e+37
    %v492 = vand.u32 %v465, 2147483648
    %v493 = vor.u32 1.1754944e-38, %v492
    %v494 = vsel %vm491, %v493, %v489
    %v495 = vmul.f32 1.0, %v494
    %v496 = vtanh.pop %v456
    %v497 = vtanh.pop %v457
    %v500 = vrot.slane %v410, 7
    %v501 = vrot.slane %v411, 7
    %v504 = vmul.f32 %v480, %v500
    %v505 = vmul.f32 %v495, %v501
    %508 = vrot.lane.b32.xlu0 %v496, 80
    %v509 = vpop.permute.xlu0 %508
    %510 = vrot.lane.b32.xlu0 %v497, 80
    %v511 = vpop.permute.xlu0 %510
    %v514 = vmul.f32 %v480, %v509
    %v515 = vmul.f32 %v495, %v511
    %518 = vrot.lane.b32.xlu0 %v514, 16
    %v519 = vpop.permute.xlu0 %518
    %520 = vrot.lane.b32.xlu0 %v515, 16
    %v521 = vpop.permute.xlu0 %520
    %v524 = vadd.f32 %v504, %v519
    %v525 = vadd.f32 %v505, %v521
    %v526 = vtanh.pop %v524
    %v527 = vtanh.pop %v525
    %530 = vrot.lane.b32.xlu0 %v526, 16
    %v531 = vpop.permute.xlu0 %530
    %532 = vrot.lane.b32.xlu0 %v527, 16
    %v533 = vpop.permute.xlu0 %532
    %v536 = vmul.f32 %v480, %v531
    %v537 = vmul.f32 %v495, %v533
    %v540 = vrot.slane %v536, 1
    %v541 = vsel %vm271, %v537, %v540
    %542 = vrot.lane.b32.xlu0 %v541, 96
    %v543 = vpop.permute.xlu0 %542
    %v544 = vsel %vm320, %v543, 0
    %546 = vmatpush.msra.mxu0 0.0
    %547 = vmatpush.msra.mxu0 0.0
    %548 = vmatpush.msra.mxu0 0.0
    %549 = vmatpush.msra.mxu0 0.0
    %550 = vmatpush.msra.mxu0 0.0
    %551 = vmatpush.msra.mxu0 0.0
    %552 = vmatpush.msra.mxu0 0.0
    %553 = vmatpush.msra.mxu0 0.0
    %554 = vmatpush.msra.mxu0 0.0
    %555 = vmatpush.msra.mxu0 0.0
    %556 = vmatpush.msra.mxu0 0.0
    %557 = vmatpush.msra.mxu0 0.0
    %558 = vmatpush.msra.mxu0 0.0
    %559 = vmatpush.msra.mxu0 0.0
    %560 = vmatpush.msra.mxu0 %v250
    %561 = vmatpush.msra.mxu0 %v249
    %562 = vmatmul.f32.gmra.mxu0 %v544
    %v563 = vpop.f32.mrf.mxu0
    %v564 = vadd.f32 0.0, %v563
    %565 = vdwg.mxu0
    %v567 = vrot.slane %v564, 6
    %v568 = vrot.slane %v564, 7
    %v571 = vadd.f32 %v315, %v567
    %v572 = vadd.f32 %v318, %v568
    %v573 = vxor.u32 %v571, 2147483648
    %v574 = vxor.u32 %v572, 2147483648
    %v575 = vmul.f32 %v573, 1.442695
    %v576 = vpow.pop %v575
    %v577 = vmul.f32 %v574, 1.442695
    %v578 = vpow.pop %v577
    %v579 = vadd.f32 %v576, 1.0
    %v580 = vadd.f32 %v578, 1.0
    %v581 = vrcp.pop %v579
    %v582 = vmul.f32 %v579, %v581
    %v583 = vsub.f32 1.0, %v582
    %v584 = vmul.f32 %v581, %v583
    %v585 = vadd.f32 %v581, %v584
    %vm586 = vweird.f32 %v579
    %vm587 = vweird.f32 %v581
    %vm588 = vmor %vm586, %vm587
    %v589 = vsel %vm588, %v581, %v585
    %v590 = vand.u32 2147483647, %v579
    %vm591 = vcmp.eq.f32.partialorder %v590, 8.507059e+37
    %v592 = vand.u32 %v579, 2147483648
    %v593 = vor.u32 1.1754944e-38, %v592
    %v594 = vsel %vm591, %v593, %v589
    %v595 = vmul.f32 1.0, %v594
    %v596 = vrcp.pop %v580
    %v597 = vmul.f32 %v580, %v596
    %v598 = vsub.f32 1.0, %v597
    %v599 = vmul.f32 %v596, %v598
    %v600 = vadd.f32 %v596, %v599
    %vm601 = vweird.f32 %v580
    %vm602 = vweird.f32 %v596
    %vm603 = vmor %vm601, %vm602
    %v604 = vsel %vm603, %v596, %v600
    %v605 = vand.u32 2147483647, %v580
    %vm606 = vcmp.eq.f32.partialorder %v605, 8.507059e+37
    %v607 = vand.u32 %v580, 2147483648
    %v608 = vor.u32 1.1754944e-38, %v607
    %v609 = vsel %vm606, %v608, %v604
    %v610 = vmul.f32 1.0, %v609
    %v611 = vtanh.pop %v571
    %v612 = vtanh.pop %v572
    %v615 = vrot.slane %v524, 7
    %v616 = vrot.slane %v525, 7
    %v619 = vmul.f32 %v595, %v615
    %v620 = vmul.f32 %v610, %v616
    %623 = vrot.lane.b32.xlu0 %v611, 80
    %v624 = vpop.permute.xlu0 %623
    %625 = vrot.lane.b32.xlu0 %v612, 80
    %v626 = vpop.permute.xlu0 %625
    %v629 = vmul.f32 %v595, %v624
    %v630 = vmul.f32 %v610, %v626
    %633 = vrot.lane.b32.xlu0 %v629, 16
    %v634 = vpop.permute.xlu0 %633
    %635 = vrot.lane.b32.xlu0 %v630, 16
    %v636 = vpop.permute.xlu0 %635
    %v639 = vadd.f32 %v619, %v634
    %v640 = vadd.f32 %v620, %v636
    %v641 = vtanh.pop %v639
    %v642 = vtanh.pop %v640
    %645 = vrot.lane.b32.xlu0 %v641, 16
    %v646 = vpop.permute.xlu0 %645
    %647 = vrot.lane.b32.xlu0 %v642, 16
    %v648 = vpop.permute.xlu0 %647
    %v651 = vmul.f32 %v595, %v646
    %v652 = vmul.f32 %v610, %v648
    %v655 = vrot.slane %v651, 2
    %v656 = vrot.slane %v652, 1
    %v657 = vsel %vm271, %v656, %v655
    %658 = vrot.lane.b32.xlu0 %v657, 96
    %v659 = vpop.permute.xlu0 %658
    %v660 = vsel %vm320, %v659, 0
    %662 = vmatpush.msra.mxu0 0.0
    %663 = vmatpush.msra.mxu0 0.0
    %664 = vmatpush.msra.mxu0 0.0
    %665 = vmatpush.msra.mxu0 0.0
    %666 = vmatpush.msra.mxu0 0.0
    %667 = vmatpush.msra.mxu0 0.0
    %668 = vmatpush.msra.mxu0 0.0
    %669 = vmatpush.msra.mxu0 0.0
    %670 = vmatpush.msra.mxu0 0.0
    %671 = vmatpush.msra.mxu0 0.0
    %672 = vmatpush.msra.mxu0 0.0
    %673 = vmatpush.msra.mxu0 0.0
    %674 = vmatpush.msra.mxu0 0.0
    %675 = vmatpush.msra.mxu0 0.0
    %676 = vmatpush.msra.mxu0 %v250
    %677 = vmatpush.msra.mxu0 %v249
    %678 = vmatmul.f32.gmra.mxu0 %v660
    %v679 = vpop.f32.mrf.mxu0
    %v680 = vadd.f32 0.0, %v679
    %681 = vdwg.mxu0
    %v683 = vrot.slane %v680, 5
    %v684 = vrot.slane %v680, 6
    %v687 = vadd.f32 %v315, %v683
    %v688 = vadd.f32 %v318, %v684
    %v689 = vxor.u32 %v687, 2147483648
    %v690 = vxor.u32 %v688, 2147483648
    %v691 = vmul.f32 %v689, 1.442695
    %v692 = vpow.pop %v691
    %v693 = vmul.f32 %v690, 1.442695
    %v694 = vpow.pop %v693
    %v695 = vadd.f32 %v692, 1.0
    %v696 = vadd.f32 %v694, 1.0
    %v697 = vrcp.pop %v695
    %v698 = vmul.f32 %v695, %v697
    %v699 = vsub.f32 1.0, %v698
    %v700 = vmul.f32 %v697, %v699
    %v701 = vadd.f32 %v697, %v700
    %vm702 = vweird.f32 %v695
    %vm703 = vweird.f32 %v697
    %vm704 = vmor %vm702, %vm703
    %v705 = vsel %vm704, %v697, %v701
    %v706 = vand.u32 2147483647, %v695
    %vm707 = vcmp.eq.f32.partialorder %v706, 8.507059e+37
    %v708 = vand.u32 %v695, 2147483648
    %v709 = vor.u32 1.1754944e-38, %v708
    %v710 = vsel %vm707, %v709, %v705
    %v711 = vmul.f32 1.0, %v710
    %v712 = vrcp.pop %v696
    %v713 = vmul.f32 %v696, %v712
    %v714 = vsub.f32 1.0, %v713
    %v715 = vmul.f32 %v712, %v714
    %v716 = vadd.f32 %v712, %v715
    %vm717 = vweird.f32 %v696
    %vm718 = vweird.f32 %v712
    %vm719 = vmor %vm717, %vm718
    %v720 = vsel %vm719, %v712, %v716
    %v721 = vand.u32 2147483647, %v696
    %vm722 = vcmp.eq.f32.partialorder %v721, 8.507059e+37
    %v723 = vand.u32 %v696, 2147483648
    %v724 = vor.u32 1.1754944e-38, %v723
    %v725 = vsel %vm722, %v724, %v720
    %v726 = vmul.f32 1.0, %v725
    %v727 = vtanh.pop %v687
    %v728 = vtanh.pop %v688
    %v731 = vrot.slane %v639, 7
    %v732 = vrot.slane %v640, 7
    %v735 = vmul.f32 %v711, %v731
    %v736 = vmul.f32 %v726, %v732
    %739 = vrot.lane.b32.xlu0 %v727, 80
    %v740 = vpop.permute.xlu0 %739
    %741 = vrot.lane.b32.xlu0 %v728, 80
    %v742 = vpop.permute.xlu0 %741
    %v745 = vmul.f32 %v711, %v740
    %v746 = vmul.f32 %v726, %v742
    %749 = vrot.lane.b32.xlu0 %v745, 16
    %v750 = vpop.permute.xlu0 %749
    %751 = vrot.lane.b32.xlu0 %v746, 16
    %v752 = vpop.permute.xlu0 %751
    %v755 = vadd.f32 %v735, %v750
    %v756 = vadd.f32 %v736, %v752
    %v757 = vtanh.pop %v755
    %v758 = vtanh.pop %v756
    %761 = vrot.lane.b32.xlu0 %v757, 16
    %v762 = vpop.permute.xlu0 %761
    %763 = vrot.lane.b32.xlu0 %v758, 16
    %v764 = vpop.permute.xlu0 %763
    %v767 = vmul.f32 %v711, %v762
    %v768 = vmul.f32 %v726, %v764
    %v771 = vrot.slane %v767, 3
    %v772 = vrot.slane %v768, 2
    %v773 = vsel %vm271, %v772, %v771
    %774 = vrot.lane.b32.xlu0 %v773, 96
    %v775 = vpop.permute.xlu0 %774
    %v776 = vsel %vm320, %v775, 0
    %778 = vmatpush.msra.mxu0 0.0
    %779 = vmatpush.msra.mxu0 0.0
    %780 = vmatpush.msra.mxu0 0.0
    %781 = vmatpush.msra.mxu0 0.0
    %782 = vmatpush.msra.mxu0 0.0
    %783 = vmatpush.msra.mxu0 0.0
    %784 = vmatpush.msra.mxu0 0.0
    %785 = vmatpush.msra.mxu0 0.0
    %786 = vmatpush.msra.mxu0 0.0
    %787 = vmatpush.msra.mxu0 0.0
    %788 = vmatpush.msra.mxu0 0.0
    %789 = vmatpush.msra.mxu0 0.0
    %790 = vmatpush.msra.mxu0 0.0
    %791 = vmatpush.msra.mxu0 0.0
    %792 = vmatpush.msra.mxu0 %v250
    %793 = vmatpush.msra.mxu0 %v249
    %794 = vmatmul.f32.gmra.mxu0 %v776
    %v795 = vpop.f32.mrf.mxu0
    %v796 = vadd.f32 0.0, %v795
    %797 = vdwg.mxu0
    %v799 = vrot.slane %v796, 4
    %v800 = vrot.slane %v796, 5
    %v803 = vadd.f32 %v315, %v799
    %v804 = vadd.f32 %v318, %v800
    %v805 = vxor.u32 %v803, 2147483648
    %v806 = vxor.u32 %v804, 2147483648
    %v807 = vmul.f32 %v805, 1.442695
    %v808 = vpow.pop %v807
    %v809 = vmul.f32 %v806, 1.442695
    %v810 = vpow.pop %v809
    %v811 = vadd.f32 %v808, 1.0
    %v812 = vadd.f32 %v810, 1.0
    %v813 = vrcp.pop %v811
    %v814 = vmul.f32 %v811, %v813
    %v815 = vsub.f32 1.0, %v814
    %v816 = vmul.f32 %v813, %v815
    %v817 = vadd.f32 %v813, %v816
    %vm818 = vweird.f32 %v811
    %vm819 = vweird.f32 %v813
    %vm820 = vmor %vm818, %vm819
    %v821 = vsel %vm820, %v813, %v817
    %v822 = vand.u32 2147483647, %v811
    %vm823 = vcmp.eq.f32.partialorder %v822, 8.507059e+37
    %v824 = vand.u32 %v811, 2147483648
    %v825 = vor.u32 1.1754944e-38, %v824
    %v826 = vsel %vm823, %v825, %v821
    %v827 = vmul.f32 1.0, %v826
    %v828 = vrcp.pop %v812
    %v829 = vmul.f32 %v812, %v828
    %v830 = vsub.f32 1.0, %v829
    %v831 = vmul.f32 %v828, %v830
    %v832 = vadd.f32 %v828, %v831
    %vm833 = vweird.f32 %v812
    %vm834 = vweird.f32 %v828
    %vm835 = vmor %vm833, %vm834
    %v836 = vsel %vm835, %v828, %v832
    %v837 = vand.u32 2147483647, %v812
    %vm838 = vcmp.eq.f32.partialorder %v837, 8.507059e+37
    %v839 = vand.u32 %v812, 2147483648
    %v840 = vor.u32 1.1754944e-38, %v839
    %v841 = vsel %vm838, %v840, %v836
    %v842 = vmul.f32 1.0, %v841
    %v843 = vtanh.pop %v803
    %v844 = vtanh.pop %v804
    %v847 = vrot.slane %v755, 7
    %v848 = vrot.slane %v756, 7
    %v851 = vmul.f32 %v827, %v847
    %v852 = vmul.f32 %v842, %v848
    %855 = vrot.lane.b32.xlu0 %v843, 80
    %v856 = vpop.permute.xlu0 %855
    %857 = vrot.lane.b32.xlu0 %v844, 80
    %v858 = vpop.permute.xlu0 %857
    %v861 = vmul.f32 %v827, %v856
    %v862 = vmul.f32 %v842, %v858
    %865 = vrot.lane.b32.xlu0 %v861, 16
    %v866 = vpop.permute.xlu0 %865
    %867 = vrot.lane.b32.xlu0 %v862, 16
    %v868 = vpop.permute.xlu0 %867
    %v871 = vadd.f32 %v851, %v866
    %v872 = vadd.f32 %v852, %v868
    %v873 = vtanh.pop %v871
    %v874 = vtanh.pop %v872
    %877 = vrot.lane.b32.xlu0 %v873, 16
    %v878 = vpop.permute.xlu0 %877
    %879 = vrot.lane.b32.xlu0 %v874, 16
    %v880 = vpop.permute.xlu0 %879
    %v883 = vmul.f32 %v827, %v878
    %v884 = vmul.f32 %v842, %v880
    %v887 = vrot.slane %v883, 4
    %v888 = vrot.slane %v884, 3
    %v889 = vsel %vm271, %v888, %v887
    %890 = vrot.lane.b32.xlu0 %v889, 96
    %v891 = vpop.permute.xlu0 %890
    %v892 = vsel %vm320, %v891, 0
    %894 = vmatpush.msra.mxu0 0.0
    %895 = vmatpush.msra.mxu0 0.0
    %896 = vmatpush.msra.mxu0 0.0
    %897 = vmatpush.msra.mxu0 0.0
    %898 = vmatpush.msra.mxu0 0.0
    %899 = vmatpush.msra.mxu0 0.0
    %900 = vmatpush.msra.mxu0 0.0
    %901 = vmatpush.msra.mxu0 0.0
    %902 = vmatpush.msra.mxu0 0.0
    %903 = vmatpush.msra.mxu0 0.0
    %904 = vmatpush.msra.mxu0 0.0
    %905 = vmatpush.msra.mxu0 0.0
    %906 = vmatpush.msra.mxu0 0.0
    %907 = vmatpush.msra.mxu0 0.0
    %908 = vmatpush.msra.mxu0 %v250
    %909 = vmatpush.msra.mxu0 %v249
    %910 = vmatmul.f32.gmra.mxu0 %v892
    %v911 = vpop.f32.mrf.mxu0
    %v912 = vadd.f32 0.0, %v911
    %913 = vdwg.mxu0
    %v915 = vrot.slane %v912, 3
    %v916 = vrot.slane %v912, 4
    %v919 = vadd.f32 %v315, %v915
    %v920 = vadd.f32 %v318, %v916
    %v921 = vxor.u32 %v919, 2147483648
    %v922 = vxor.u32 %v920, 2147483648
    %v923 = vmul.f32 %v921, 1.442695
    %v924 = vpow.pop %v923
    %v925 = vmul.f32 %v922, 1.442695
    %v926 = vpow.pop %v925
    %v927 = vadd.f32 %v924, 1.0
    %v928 = vadd.f32 %v926, 1.0
    %v929 = vrcp.pop %v927
    %v930 = vmul.f32 %v927, %v929
    %v931 = vsub.f32 1.0, %v930
    %v932 = vmul.f32 %v929, %v931
    %v933 = vadd.f32 %v929, %v932
    %vm934 = vweird.f32 %v927
    %vm935 = vweird.f32 %v929
    %vm936 = vmor %vm934, %vm935
    %v937 = vsel %vm936, %v929, %v933
    %v938 = vand.u32 2147483647, %v927
    %vm939 = vcmp.eq.f32.partialorder %v938, 8.507059e+37
    %v940 = vand.u32 %v927, 2147483648
    %v941 = vor.u32 1.1754944e-38, %v940
    %v942 = vsel %vm939, %v941, %v937
    %v943 = vmul.f32 1.0, %v942
    %v944 = vrcp.pop %v928
    %v945 = vmul.f32 %v928, %v944
    %v946 = vsub.f32 1.0, %v945
    %v947 = vmul.f32 %v944, %v946
    %v948 = vadd.f32 %v944, %v947
    %vm949 = vweird.f32 %v928
    %vm950 = vweird.f32 %v944
    %vm951 = vmor %vm949, %vm950
    %v952 = vsel %vm951, %v944, %v948
    %v953 = vand.u32 2147483647, %v928
    %vm954 = vcmp.eq.f32.partialorder %v953, 8.507059e+37
    %v955 = vand.u32 %v928, 2147483648
    %v956 = vor.u32 1.1754944e-38, %v955
    %v957 = vsel %vm954, %v956, %v952
    %v958 = vmul.f32 1.0, %v957
    %v959 = vtanh.pop %v919
    %v960 = vtanh.pop %v920
    %v963 = vrot.slane %v871, 7
    %v964 = vrot.slane %v872, 7
    %v967 = vmul.f32 %v943, %v963
    %v968 = vmul.f32 %v958, %v964
    %971 = vrot.lane.b32.xlu0 %v959, 80
    %v972 = vpop.permute.xlu0 %971
    %973 = vrot.lane.b32.xlu0 %v960, 80
    %v974 = vpop.permute.xlu0 %973
    %v977 = vmul.f32 %v943, %v972
    %v978 = vmul.f32 %v958, %v974
    %981 = vrot.lane.b32.xlu0 %v977, 16
    %v982 = vpop.permute.xlu0 %981
    %983 = vrot.lane.b32.xlu0 %v978, 16
    %v984 = vpop.permute.xlu0 %983
    %v987 = vadd.f32 %v967, %v982
    %v988 = vadd.f32 %v968, %v984
    %v989 = vtanh.pop %v987
    %v990 = vtanh.pop %v988
    %993 = vrot.lane.b32.xlu0 %v989, 16
    %v994 = vpop.permute.xlu0 %993
    %995 = vrot.lane.b32.xlu0 %v990, 16
    %v996 = vpop.permute.xlu0 %995
    %v999 = vmul.f32 %v943, %v994
    %v1000 = vmul.f32 %v958, %v996
    %v1003 = vrot.slane %v999, 5
    %v1004 = vrot.slane %v1000, 4
    %v1005 = vsel %vm271, %v1004, %v1003
    %1006 = vrot.lane.b32.xlu0 %v1005, 96
    %v1007 = vpop.permute.xlu0 %1006
    %v1008 = vsel %vm320, %v1007, 0
    %1010 = vmatpush.msra.mxu0 0.0
    %1011 = vmatpush.msra.mxu0 0.0
    %1012 = vmatpush.msra.mxu0 0.0
    %1013 = vmatpush.msra.mxu0 0.0
    %1014 = vmatpush.msra.mxu0 0.0
    %1015 = vmatpush.msra.mxu0 0.0
    %1016 = vmatpush.msra.mxu0 0.0
    %1017 = vmatpush.msra.mxu0 0.0
    %1018 = vmatpush.msra.mxu0 0.0
    %1019 = vmatpush.msra.mxu0 0.0
    %1020 = vmatpush.msra.mxu0 0.0
    %1021 = vmatpush.msra.mxu0 0.0
    %1022 = vmatpush.msra.mxu0 0.0
    %1023 = vmatpush.msra.mxu0 0.0
    %1024 = vmatpush.msra.mxu0 %v250
    %1025 = vmatpush.msra.mxu0 %v249
    %1026 = vmatmul.f32.gmra.mxu0 %v1008
    %v1027 = vpop.f32.mrf.mxu0
    %v1028 = vadd.f32 0.0, %v1027
    %1029 = vdwg.mxu0
    %v1031 = vrot.slane %v1028, 2
    %v1032 = vrot.slane %v1028, 3
    %v1035 = vadd.f32 %v315, %v1031
    %v1036 = vadd.f32 %v318, %v1032
    %v1037 = vxor.u32 %v1035, 2147483648
    %v1038 = vxor.u32 %v1036, 2147483648
    %v1039 = vmul.f32 %v1037, 1.442695
    %v1040 = vpow.pop %v1039
    %v1041 = vmul.f32 %v1038, 1.442695
    %v1042 = vpow.pop %v1041
    %v1043 = vadd.f32 %v1040, 1.0
    %v1044 = vadd.f32 %v1042, 1.0
    %v1045 = vrcp.pop %v1043
    %v1046 = vmul.f32 %v1043, %v1045
    %v1047 = vsub.f32 1.0, %v1046
    %v1048 = vmul.f32 %v1045, %v1047
    %v1049 = vadd.f32 %v1045, %v1048
    %vm1050 = vweird.f32 %v1043
    %vm1051 = vweird.f32 %v1045
    %vm1052 = vmor %vm1050, %vm1051
    %v1053 = vsel %vm1052, %v1045, %v1049
    %v1054 = vand.u32 2147483647, %v1043
    %vm1055 = vcmp.eq.f32.partialorder %v1054, 8.507059e+37
    %v1056 = vand.u32 %v1043, 2147483648
    %v1057 = vor.u32 1.1754944e-38, %v1056
    %v1058 = vsel %vm1055, %v1057, %v1053
    %v1059 = vmul.f32 1.0, %v1058
    %v1060 = vrcp.pop %v1044
    %v1061 = vmul.f32 %v1044, %v1060
    %v1062 = vsub.f32 1.0, %v1061
    %v1063 = vmul.f32 %v1060, %v1062
    %v1064 = vadd.f32 %v1060, %v1063
    %vm1065 = vweird.f32 %v1044
    %vm1066 = vweird.f32 %v1060
    %vm1067 = vmor %vm1065, %vm1066
    %v1068 = vsel %vm1067, %v1060, %v1064
    %v1069 = vand.u32 2147483647, %v1044
    %vm1070 = vcmp.eq.f32.partialorder %v1069, 8.507059e+37
    %v1071 = vand.u32 %v1044, 2147483648
    %v1072 = vor.u32 1.1754944e-38, %v1071
    %v1073 = vsel %vm1070, %v1072, %v1068
    %v1074 = vmul.f32 1.0, %v1073
    %v1075 = vtanh.pop %v1035
    %v1076 = vtanh.pop %v1036
    %v1079 = vrot.slane %v987, 7
    %v1080 = vrot.slane %v988, 7
    %v1083 = vmul.f32 %v1059, %v1079
    %v1084 = vmul.f32 %v1074, %v1080
    %1087 = vrot.lane.b32.xlu0 %v1075, 80
    %v1088 = vpop.permute.xlu0 %1087
    %1089 = vrot.lane.b32.xlu0 %v1076, 80
    %v1090 = vpop.permute.xlu0 %1089
    %v1093 = vmul.f32 %v1059, %v1088
    %v1094 = vmul.f32 %v1074, %v1090
    %1097 = vrot.lane.b32.xlu0 %v1093, 16
    %v1098 = vpop.permute.xlu0 %1097
    %1099 = vrot.lane.b32.xlu0 %v1094, 16
    %v1100 = vpop.permute.xlu0 %1099
    %v1103 = vadd.f32 %v1083, %v1098
    %v1104 = vadd.f32 %v1084, %v1100
    %v1105 = vtanh.pop %v1103
    %v1106 = vtanh.pop %v1104
    %1109 = vrot.lane.b32.xlu0 %v1105, 16
    %v1110 = vpop.permute.xlu0 %1109
    %1111 = vrot.lane.b32.xlu0 %v1106, 16
    %v1112 = vpop.permute.xlu0 %1111
    %v1115 = vmul.f32 %v1059, %v1110
    %v1116 = vmul.f32 %v1074, %v1112
    %v1119 = vrot.slane %v1115, 6
    %v1120 = vrot.slane %v1116, 5
    %v1121 = vsel %vm271, %v1120, %v1119
    %1122 = vrot.lane.b32.xlu0 %v1121, 96
    %v1123 = vpop.permute.xlu0 %1122
    %v1124 = vsel %vm320, %v1123, 0
    %1126 = vmatpush.msra.mxu0 0.0
    %1127 = vmatpush.msra.mxu0 0.0
    %1128 = vmatpush.msra.mxu0 0.0
    %1129 = vmatpush.msra.mxu0 0.0
    %1130 = vmatpush.msra.mxu0 0.0
    %1131 = vmatpush.msra.mxu0 0.0
    %1132 = vmatpush.msra.mxu0 0.0
    %1133 = vmatpush.msra.mxu0 0.0
    %1134 = vmatpush.msra.mxu0 0.0
    %1135 = vmatpush.msra.mxu0 0.0
    %1136 = vmatpush.msra.mxu0 0.0
    %1137 = vmatpush.msra.mxu0 0.0
    %1138 = vmatpush.msra.mxu0 0.0
    %1139 = vmatpush.msra.mxu0 0.0
    %1140 = vmatpush.msra.mxu0 %v250
    %1141 = vmatpush.msra.mxu0 %v249
    %1142 = vmatmul.f32.gmra.mxu0 %v1124
    %v1143 = vpop.f32.mrf.mxu0
    %v1144 = vadd.f32 0.0, %v1143
    %1145 = vdwg.mxu0
    %v1147 = vrot.slane %v1144, 1
    %v1148 = vrot.slane %v1144, 2
    %v1151 = vadd.f32 %v315, %v1147
    %v1152 = vadd.f32 %v318, %v1148
    %v1153 = vxor.u32 %v1151, 2147483648
    %v1154 = vxor.u32 %v1152, 2147483648
    %v1155 = vmul.f32 %v1153, 1.442695
    %v1156 = vpow.pop %v1155
    %v1157 = vmul.f32 %v1154, 1.442695
    %v1158 = vpow.pop %v1157
    %v1159 = vadd.f32 %v1156, 1.0
    %v1160 = vadd.f32 %v1158, 1.0
    %v1161 = vrcp.pop %v1159
    %v1162 = vmul.f32 %v1159, %v1161
    %v1163 = vsub.f32 1.0, %v1162
    %v1164 = vmul.f32 %v1161, %v1163
    %v1165 = vadd.f32 %v1161, %v1164
    %vm1166 = vweird.f32 %v1159
    %vm1167 = vweird.f32 %v1161
    %vm1168 = vmor %vm1166, %vm1167
    %v1169 = vsel %vm1168, %v1161, %v1165
    %v1170 = vand.u32 2147483647, %v1159
    %vm1171 = vcmp.eq.f32.partialorder %v1170, 8.507059e+37
    %v1172 = vand.u32 %v1159, 2147483648
    %v1173 = vor.u32 1.1754944e-38, %v1172
    %v1174 = vsel %vm1171, %v1173, %v1169
    %v1175 = vmul.f32 1.0, %v1174
    %v1176 = vrcp.pop %v1160
    %v1177 = vmul.f32 %v1160, %v1176
    %v1178 = vsub.f32 1.0, %v1177
    %v1179 = vmul.f32 %v1176, %v1178
    %v1180 = vadd.f32 %v1176, %v1179
    %vm1181 = vweird.f32 %v1160
    %vm1182 = vweird.f32 %v1176
    %vm1183 = vmor %vm1181, %vm1182
    %v1184 = vsel %vm1183, %v1176, %v1180
    %v1185 = vand.u32 2147483647, %v1160
    %vm1186 = vcmp.eq.f32.partialorder %v1185, 8.507059e+37
    %v1187 = vand.u32 %v1160, 2147483648
    %v1188 = vor.u32 1.1754944e-38, %v1187
    %v1189 = vsel %vm1186, %v1188, %v1184
    %v1190 = vmul.f32 1.0, %v1189
    %v1191 = vtanh.pop %v1151
    %v1192 = vtanh.pop %v1152
    %v1195 = vrot.slane %v1103, 7
    %v1196 = vrot.slane %v1104, 7
    %v1199 = vmul.f32 %v1175, %v1195
    %v1200 = vmul.f32 %v1190, %v1196
    %1203 = vrot.lane.b32.xlu0 %v1191, 80
    %v1204 = vpop.permute.xlu0 %1203
    %1205 = vrot.lane.b32.xlu0 %v1192, 80
    %v1206 = vpop.permute.xlu0 %1205
    %v1209 = vmul.f32 %v1175, %v1204
    %v1210 = vmul.f32 %v1190, %v1206
    %1213 = vrot.lane.b32.xlu0 %v1209, 16
    %v1214 = vpop.permute.xlu0 %1213
    %1215 = vrot.lane.b32.xlu0 %v1210, 16
    %v1216 = vpop.permute.xlu0 %1215
    %v1219 = vadd.f32 %v1199, %v1214
    %v1220 = vadd.f32 %v1200, %v1216
    %v1221 = vtanh.pop %v1219
    %v1222 = vtanh.pop %v1220
    %1225 = vrot.lane.b32.xlu0 %v1221, 16
    %v1226 = vpop.permute.xlu0 %1225
    %1227 = vrot.lane.b32.xlu0 %v1222, 16
    %v1228 = vpop.permute.xlu0 %1227
    %v1231 = vmul.f32 %v1175, %v1226
    %v1232 = vmul.f32 %v1190, %v1228
    %1234 = vrot.lane.b32.xlu0 %v541, 112
    %v1235 = vpop.permute.xlu0 %1234
    %1238 = vrot.lane.b32.xlu0 %v773, 16
    %v1239 = vpop.permute.xlu0 %1238
    %1241 = vrot.lane.b32.xlu0 %v889, 32
    %v1242 = vpop.permute.xlu0 %1241
    %1244 = vrot.lane.b32.xlu0 %v1005, 48
    %v1245 = vpop.permute.xlu0 %1244
    %1247 = vrot.lane.b32.xlu0 %v1121, 64
    %v1248 = vpop.permute.xlu0 %1247
    %v1252 = vrot.slane %v1231, 7
    %v1253 = vrot.slane %v1232, 6
    %v1254 = vsel %vm271, %v1253, %v1252
    %1255 = vrot.lane.b32.xlu0 %v1254, 80
    %v1256 = vpop.permute.xlu0 %1255
    %v1258 = vsel %vm320, %v429, %v1235
    %v1259 = vsel %vm292, %v1258, %v657
    %vm1260 = vcmask 392192
    %v1261 = vsel %vm1260, %v1259, %v1239
    %vm1262 = vcmask 523264
    %v1263 = vsel %vm1262, %v1261, %v1242
    %vm1264 = vcmask 654336
    %v1265 = vsel %vm1264, %v1263, %v1245
    %vm1266 = vcmask 785408
    %v1267 = vsel %vm1266, %v1265, %v1248
    %vm1268 = vcmask 916480
    %v1269 = vsel %vm1268, %v1267, %v1256
    %v1270 = vld [vmem:[%s6] sm:$0xff]
    %v1271 = vld [vmem:[%s6 + $0x8] sm:$0xff]
    %v1272 = vld [vmem:[%s6 + $0x10] sm:$0xff]
    %v1273 = vld [vmem:[%s6 + $0x18] sm:$0xff]
    %v1274 = vld [vmem:[%s6 + $0x20] sm:$0xff]
    %v1275 = vld [vmem:[%s6 + $0x28] sm:$0xff]
    %v1276 = vld [vmem:[%s6 + $0x30] sm:$0xff]
    %v1277 = vld [vmem:[%s6 + $0x38] sm:$0xff]
    %v1278 = vld [vmem:[%s6 + $0x40] sm:$0xff]
    %v1279 = vld [vmem:[%s6 + $0x48] sm:$0xff]
    %v1280 = vld [vmem:[%s6 + $0x50] sm:$0xff]
    %v1281 = vld [vmem:[%s6 + $0x58] sm:$0xff]
    %v1282 = vld [vmem:[%s6 + $0x60] sm:$0xff]
    %v1283 = vld [vmem:[%s6 + $0x68] sm:$0xff]
    %v1284 = vld [vmem:[%s6 + $0x70] sm:$0xff]
    %v1285 = vld [vmem:[%s6 + $0x78] sm:$0xff]
    %v1286 = vld [vmem:[%s7] sm:$0x1]
    %v1288 = vperm.slane %v1286, 0
    %1290 = vmatpush.msra.mxu0 %v1285
    %1291 = vmatpush.msra.mxu0 %v1284
    %1292 = vmatpush.msra.mxu0 %v1283
    %1293 = vmatpush.msra.mxu0 %v1282
    %1294 = vmatpush.msra.mxu0 %v1281
    %1295 = vmatpush.msra.mxu0 %v1280
    %1296 = vmatpush.msra.mxu0 %v1279
    %1297 = vmatpush.msra.mxu0 %v1278
    %1298 = vmatpush.msra.mxu0 %v1277
    %1299 = vmatpush.msra.mxu0 %v1276
    %1300 = vmatpush.msra.mxu0 %v1275
    %1301 = vmatpush.msra.mxu0 %v1274
    %1302 = vmatpush.msra.mxu0 %v1273
    %1303 = vmatpush.msra.mxu0 %v1272
    %1304 = vmatpush.msra.mxu0 %v1271
    %1305 = vmatpush.msra.mxu0 %v1270
    %1306 = vmatmul.f32.gmra.mxu0 %v1269
    %v1307 = vpop.f32.mrf.mxu0
    %v1308 = vadd.f32 %v1288, %v1307
    %1309 = vdwg.mxu0
    %vm1310 = vcmp.ge.f32.partialorder %v1308, 0.0
    %v1311 = vmul.f32 %v1308, 0.9
    %v1312 = vsel %vm1310, %v1308, %v1311
    %v1313 = vld [vmem:[%s8] sm:$0xff]
    %v1314 = vld [vmem:[%s8 + $0x8] sm:$0xff]
    %v1315 = vld [vmem:[%s9] sm:$0x1]
    %v1317 = vperm.slane %v1315, 0
    %v1320 = vsel %vm320, %v1312, 0
    %1322 = vmatpush.msra.mxu0 0.0
    %1323 = vmatpush.msra.mxu0 0.0
    %1324 = vmatpush.msra.mxu0 0.0
    %1325 = vmatpush.msra.mxu0 0.0
    %1326 = vmatpush.msra.mxu0 0.0
    %1327 = vmatpush.msra.mxu0 0.0
    %1328 = vmatpush.msra.mxu0 0.0
    %1329 = vmatpush.msra.mxu0 0.0
    %1330 = vmatpush.msra.mxu0 0.0
    %1331 = vmatpush.msra.mxu0 0.0
    %1332 = vmatpush.msra.mxu0 0.0
    %1333 = vmatpush.msra.mxu0 0.0
    %1334 = vmatpush.msra.mxu0 0.0
    %1335 = vmatpush.msra.mxu0 0.0
    %1336 = vmatpush.msra.mxu0 %v1314
    %1337 = vmatpush.msra.mxu0 %v1313
    %1338 = vmatmul.f32.gmra.mxu0 %v1320
    %v1339 = vpop.f32.mrf.mxu0
    %v1340 = vadd.f32 %v1317, %v1339
    %1341 = vdwg.mxu0
    %vm1342 = vcmp.ge.f32.partialorder %v1340, 0.0
    %v1343 = vmul.f32 %v1340, 0.9
    %v1344 = vsel %vm1342, %v1340, %v1343
    %vm1345 = vcmask 58368
    %v1346 = vsel %vm1345, %v1344, -inf
    %1347 = vmax.xlane.f32.xlu0 %v1346
    %v1348 = vpop.xlane.xlu0 %1347
    %v1349 = vsub.f32 %v1344, %v1348
    %v1350 = vmul.f32 %v1349, 1.442695
    %v1351 = vpow.pop %v1350
    %v1352 = vsel %vm1345, %v1351, 0.0
    %1353 = vadd.xlane.f32.xlu0 %v1352
    %v1354 = vpop.xlane.xlu0 %1353
    %v1355 = vlog2.pop %v1354
    %v1356 = vmul.f32 %v1355, 0.6931472
    %v1357 = vsub.f32 %v1349, %v1356
    %v1359 = vrot.slane %v1357, 1
    %vm1361 = vcmask 57344
    %1362 = vst.msk [vmem:[#allocation2] sm:$0x1] %vm1361, %v1357
    %1363 = vst.msk [vmem:[#allocation2 + $0x1] sm:$0x1] %vm1361, %v1359
    // Predicated region
    $region42: #{tpu_custom_call.1} parent=1 // pred_check
      _
    $region43: #{tpu_custom_call.1} parent=1 // pred_check_branch
      %1365 = sbr.rel (0) target = $region45
    $region44: #{tpu_custom_call.1} parent=1 // pred_region
      %1367 = vsyncadd [#allocation3], 0
      %s1368 = sshll.u32 [#allocation2], 4
      %s1369 = int_to_ptr.vmem [resolvable:$true] %s1368
      %s1370 = sshll.u32 %s10, 4
      %s1371 = int_to_ptr.hbm [resolvable:$true] %s1370
      %1376 = dma.vmem_to_hbm [thread:$0]  %s1369, 32, %s1371, [#allocation3], 16, 16, 1
    $region45: #{tpu_custom_call.1} parent=1 // pred_fallthru
      _
    // Predicated region
    $region46: #{tpu_custom_call.1} parent=1 // pred_check
      _
    $region47: #{tpu_custom_call.1} parent=1 // pred_check_branch
      %1378 = sbr.rel (0) target = $region49
    $region48: #{tpu_custom_call.1} parent=1 // pred_region
      %1380 = dma.done [#allocation3], 32
    $region49: #{tpu_custom_call.1} parent=1 // pred_fallthru
      _
    %1381 = vsyncpa [#allocation3], 1

</llo_original>
